<compile_context>
chip_gen: v6e
topology: v6e:2x2x1
jax: 0.10.0
libtpu: 0.0.40
codegen_flags: <defaults>
</compile_context>

<pallas_src>
import functools

import numpy as np
import jax
import jax.numpy as jnp
from jax import lax
from jax.experimental import pallas as pl
from jax.experimental.pallas import tpu as pltpu

WINDOW_SIZE = 11
SIGMA = 1.5
C1 = 0.01 ** 2
C2 = 0.03 ** 2


def _gaussian_1d(size, sigma):
    # Matches torch gaussian_kernel(size, sigma): the 2-D window is the outer
    # product of this normalized 1-D Gaussian with itself.
    coords = np.arange(size, dtype=np.float64) - size // 2
    g = np.exp(-(coords ** 2) / (2.0 * sigma ** 2))
    return (g / g.sum()).astype(np.float32)


def _band_toeplitz(n, g):
    """T[r, c] = g[c - r + len(g)//2], zero outside the band.

    `T @ x` is a "same" zero-padded 1-D correlation of x's row axis with taps
    g (g is symmetric here, so T is symmetric).
    """
    half = len(g) // 2
    idx = np.arange(n)
    d = idx[None, :] - idx[:, None] + half
    valid = (d >= 0) & (d < len(g))
    vals = np.asarray(g, np.float32)[np.clip(d, 0, len(g) - 1)]
    return np.where(valid, vals, 0.0).astype(np.float32)


def _ssim_kernel(img1_ref, img2_ref, tw_ref, th_ref, out_ref, stack_ref,
                 *, exact_divide):
    c_blk, H, W = img1_ref.shape
    CH = c_blk * H
    Q = 5 * c_blk

    x1 = img1_ref[...].reshape(CH, W)        # f32
    x2 = img2_ref[...].reshape(CH, W)

    # Write the five conv inputs (bf16) straight into one VMEM slab: no
    # jnp.concatenate copy, and x1/x2 are materialized exactly once.
    # Products are formed in f32 on the VPU and cast at the store.
    # (For best layout, CH should be a multiple of 16 -- bf16 sublane pack.)
    stack_ref[0 * CH:1 * CH, :] = x1.astype(jnp.bfloat16)
    stack_ref[1 * CH:2 * CH, :] = x2.astype(jnp.bfloat16)
    stack_ref[2 * CH:3 * CH, :] = (x1 * x1).astype(jnp.bfloat16)
    stack_ref[3 * CH:4 * CH, :] = (x2 * x2).astype(jnp.bfloat16)
    stack_ref[4 * CH:5 * CH, :] = (x1 * x2).astype(jnp.bfloat16)

    tw = tw_ref[...]                         # (W, W) bf16: horizontal, x @ tw
    th = th_ref[...]                         # (H, H) bf16: vertical,   th @ x

    # Horizontal pass: one bf16 MXU matmul, f32 accumulation.
    hp = jnp.dot(stack_ref[...], tw,
                 preferred_element_type=jnp.float32)          # (5*CH, W) f32

    # Vertical pass: one batched bf16 MXU matmul over the quantity*channel
    # axis (batch, m, k) x (batch, k, n) -- no per-chunk slices or concats.
    hp_b = hp.reshape(Q, H, W).astype(jnp.bfloat16)
    th_b = jnp.broadcast_to(th[None, :, :], (Q, H, H))
    blur = lax.dot_general(
        th_b, hp_b,
        dimension_numbers=(((2,), (1,)), ((0,), (0,))),
        preferred_element_type=jnp.float32)                   # (Q, H, W) f32

    mu1 = blur[0 * c_blk:1 * c_blk]
    mu2 = blur[1 * c_blk:2 * c_blk]
    e11 = blur[2 * c_blk:3 * c_blk]
    e22 = blur[3 * c_blk:4 * c_blk]
    e12 = blur[4 * c_blk:5 * c_blk]

    mu1_sq = mu1 * mu1
    mu2_sq = mu2 * mu2
    mu1_mu2 = mu1 * mu2
    sigma1_sq = e11 - mu1_sq
    sigma2_sq = e22 - mu2_sq
    sigma12 = e12 - mu1_mu2

    num = (2.0 * mu1_mu2 + C1) * (2.0 * sigma12 + C2)
    den = (mu1_sq + mu2_sq + C1) * (sigma1_sq + sigma2_sq + C2)
    if exact_divide:
        ssim_map = num / den
    else:
        # EUP approximate reciprocal (~1e-3 relative vs. exact divide) keeps
        # the divide off the VALU; exact_divide=True is available for
        # validation against the PyTorch reference.
        ssim_map = num * pl.reciprocal(den, approx=True)

    # Per-(batch, channel-block) partial sum; tiny (1, 1) block per step keeps
    # both grid axes free of cross-step accumulation (safe for "parallel").
    out_ref[...] = jnp.ones((1, 1), jnp.float32) * jnp.sum(ssim_map)


def _vmem_limit_bytes():
    """Per-generation VMEM limit: ~96 MiB on v5e/v6e (128 MiB physical),
    ~48 MiB on v7x (64 MiB physical)."""
    cap = 128 * 1024 * 1024
    try:
        info = pltpu.get_tpu_info()
        cap = int(getattr(info, "vmem_capacity_bytes", cap))
    except Exception:
        pass
    return min((cap * 3) // 4, 96 * 1024 * 1024)


def _pick_c_block(C, H, W, budget_bytes):
    """Largest channel block (divisor of C) whose per-step working set fits."""
    def est(c):
        plane = c * H * W
        return (2 * 2 * plane * 4      # img1/img2 blocks, double-buffered
                + 5 * plane * 2        # bf16 stacked scratch
                + 5 * plane * 4        # hp (f32)
                + 5 * plane * 2        # hp (bf16)
                + 5 * c * H * H * 2    # broadcast th for the batched dot
                + 5 * plane * 4        # blur (f32)
                + 12 * plane * 4)      # epilogue temporaries (approximate)
    for c in range(C, 0, -1):
        if C % c == 0 and est(c) <= budget_bytes:
            return c
    # TODO(synk): if even one channel does not fit, a row-strip grid axis with
    # a 5-row halo is required (see header TODO); fall back to c=1 for now.
    return 1


def ssim_pallas(img1, img2, window_size=WINDOW_SIZE, size_average=True,
                exact_divide=False):
    """SSIM loss: 1 - mean(ssim_map).  Inputs are NCHW float arrays."""
    B, C, H, W = img1.shape
    assert img2.shape == img1.shape

    g = _gaussian_1d(window_size, SIGMA)
    # bf16 band matrices: MXU-native on all generations, f32 accumulation.
    th = jnp.asarray(_band_toeplitz(H, g), dtype=jnp.bfloat16)    # th @ x
    tw = jnp.asarray(_band_toeplitz(W, g).T, dtype=jnp.bfloat16)  # x @ tw

    img1 = img1.astype(jnp.float32)
    img2 = img2.astype(jnp.float32)

    vmem_limit = _vmem_limit_bytes()
    c_blk = _pick_c_block(C, H, W, (vmem_limit * 3) // 5)
    ncb = C // c_blk

    img_spec = pl.BlockSpec((None, c_blk, H, W), lambda b, cb: (b, cb, 0, 0))

    kernel = functools.partial(_ssim_kernel, exact_divide=exact_divide)

    partial = pl.pallas_call(
        kernel,
        out_shape=jax.ShapeDtypeStruct((B, ncb, 1, 1), jnp.float32),
        grid_spec=pltpu.PrefetchScalarGridSpec(
            num_scalar_prefetch=0,
            grid=(B, ncb),
            in_specs=[
                img_spec,
                img_spec,
                pl.BlockSpec((W, W), lambda b, cb: (0, 0)),   # tw, fetched once
                pl.BlockSpec((H, H), lambda b, cb: (0, 0)),   # th, fetched once
            ],
            out_specs=pl.BlockSpec((None, None, 1, 1),
                                   lambda b, cb: (b, cb, 0, 0)),
            scratch_shapes=[pltpu.VMEM((5 * c_blk * H, W), jnp.bfloat16)],
        ),
        compiler_params=pltpu.CompilerParams(
            dimension_semantics=("parallel", "parallel"),
            vmem_limit_bytes=vmem_limit,
        ),
    )(img1, img2, tw, th)

    per_image = jnp.sum(partial.reshape(B, -1), axis=1)     # sum over C,H,W
    if size_average:
        return 1.0 - jnp.sum(per_image) / float(B * C * H * W)
    # size_average=False: per-batch mean over (C, H, W), shape (B,).
    return 1.0 - per_image / float(C * H * W)


if __name__ == "__main__":
    key = jax.random.PRNGKey(0)
    k1, k2 = jax.random.split(key)
    B, C, H, W = 2, 4, 16, 16
    img1 = jax.random.uniform(k1, (B, C, H, W), dtype=jnp.float32)
    img2 = jax.random.uniform(k2, (B, C, H, W), dtype=jnp.float32)

    loss = ssim_pallas(img1, img2)
    jax.block_until_ready(loss)
    print("KERNEL_OK")
</pallas_src>

<mosaic_0001>
module attributes {stable_mosaic.version = 11 : i64} {
  func.func @_ssim_kernel(%arg0: i32, %arg1: i32, %arg2: memref<1x4x16x16xf32, #tpu.memory_space<vmem>>, %arg3: memref<1x4x16x16xf32, #tpu.memory_space<vmem>>, %arg4: memref<16x16xbf16, #tpu.memory_space<vmem>>, %arg5: memref<16x16xbf16, #tpu.memory_space<vmem>>, %arg6: memref<1x1x1x1xf32, #tpu.memory_space<vmem>>, %arg7: memref<320x16xbf16, #tpu.memory_space<vmem>>) attributes {dimension_semantics = [#tpu.dimension_semantics<parallel>, #tpu.dimension_semantics<parallel>], iteration_bounds = array<i64: 2, 1>, scalar_prefetch = 0 : i64, scratch_operands = 1 : i64, tpu.core_type = #tpu.core_type<tc>, window_params = [{transform_indices = @transform_0, window_bounds = array<i64: 1, 4, 16, 16>}, {transform_indices = @transform_1, window_bounds = array<i64: 1, 4, 16, 16>}, {pipeline_mode = #tpu.pipeline_mode<synchronous>, transform_indices = @transform_2, window_bounds = array<i64: 16, 16>}, {pipeline_mode = #tpu.pipeline_mode<synchronous>, transform_indices = @transform_3, window_bounds = array<i64: 16, 16>}, {transform_indices = @transform_4, window_bounds = array<i64: 1, 1, 1, 1>}]} {
    %c0 = arith.constant 0 : index
    %c0_0 = arith.constant 0 : index
    %c0_1 = arith.constant 0 : index
    %c0_2 = arith.constant 0 : index
    %0 = vector.load %arg2[%c0, %c0_0, %c0_1, %c0_2] : memref<1x4x16x16xf32, #tpu.memory_space<vmem>>, vector<1x4x16x16xf32>
    %1 = vector.shape_cast %0 : vector<1x4x16x16xf32> to vector<4x16x16xf32>
    %2 = vector.shape_cast %1 : vector<4x16x16xf32> to vector<64x16xf32>
    %c0_3 = arith.constant 0 : index
    %c0_4 = arith.constant 0 : index
    %c0_5 = arith.constant 0 : index
    %c0_6 = arith.constant 0 : index
    %3 = vector.load %arg3[%c0_3, %c0_4, %c0_5, %c0_6] : memref<1x4x16x16xf32, #tpu.memory_space<vmem>>, vector<1x4x16x16xf32>
    %4 = vector.shape_cast %3 : vector<1x4x16x16xf32> to vector<4x16x16xf32>
    %5 = vector.shape_cast %4 : vector<4x16x16xf32> to vector<64x16xf32>
    %6 = arith.truncf %2 : vector<64x16xf32> to vector<64x16xbf16>
    %c0_7 = arith.constant 0 : index
    %c0_8 = arith.constant 0 : index
    %7 = vector.load %arg7[%c0_7, %c0_8] : memref<320x16xbf16, #tpu.memory_space<vmem>>, vector<64x16xbf16>
    tpu.vector_store %arg7[%c0_7, %c0_8], %6 {strides = array<i32>} : memref<320x16xbf16, #tpu.memory_space<vmem>>, vector<64x16xbf16>,
    %8 = arith.truncf %5 : vector<64x16xf32> to vector<64x16xbf16>
    %c64 = arith.constant 64 : index
    %c0_9 = arith.constant 0 : index
    %9 = vector.load %arg7[%c64, %c0_9] : memref<320x16xbf16, #tpu.memory_space<vmem>>, vector<64x16xbf16>
    tpu.vector_store %arg7[%c64, %c0_9], %8 {strides = array<i32>} : memref<320x16xbf16, #tpu.memory_space<vmem>>, vector<64x16xbf16>,
    %10 = arith.mulf %2, %2 : vector<64x16xf32>
    %11 = arith.truncf %10 : vector<64x16xf32> to vector<64x16xbf16>
    %c128 = arith.constant 128 : index
    %c0_10 = arith.constant 0 : index
    %12 = vector.load %arg7[%c128, %c0_10] : memref<320x16xbf16, #tpu.memory_space<vmem>>, vector<64x16xbf16>
    tpu.vector_store %arg7[%c128, %c0_10], %11 {strides = array<i32>} : memref<320x16xbf16, #tpu.memory_space<vmem>>, vector<64x16xbf16>,
    %13 = arith.mulf %5, %5 : vector<64x16xf32>
    %14 = arith.truncf %13 : vector<64x16xf32> to vector<64x16xbf16>
    %c192 = arith.constant 192 : index
    %c0_11 = arith.constant 0 : index
    %15 = vector.load %arg7[%c192, %c0_11] : memref<320x16xbf16, #tpu.memory_space<vmem>>, vector<64x16xbf16>
    tpu.vector_store %arg7[%c192, %c0_11], %14 {strides = array<i32>} : memref<320x16xbf16, #tpu.memory_space<vmem>>, vector<64x16xbf16>,
    %16 = arith.mulf %2, %5 : vector<64x16xf32>
    %17 = arith.truncf %16 : vector<64x16xf32> to vector<64x16xbf16>
    %c256 = arith.constant 256 : index
    %c0_12 = arith.constant 0 : index
    %18 = vector.load %arg7[%c256, %c0_12] : memref<320x16xbf16, #tpu.memory_space<vmem>>, vector<64x16xbf16>
    tpu.vector_store %arg7[%c256, %c0_12], %17 {strides = array<i32>} : memref<320x16xbf16, #tpu.memory_space<vmem>>, vector<64x16xbf16>,
    %c0_13 = arith.constant 0 : index
    %c0_14 = arith.constant 0 : index
    %19 = vector.load %arg4[%c0_13, %c0_14] : memref<16x16xbf16, #tpu.memory_space<vmem>>, vector<16x16xbf16>
    %c0_15 = arith.constant 0 : index
    %c0_16 = arith.constant 0 : index
    %20 = vector.load %arg5[%c0_15, %c0_16] : memref<16x16xbf16, #tpu.memory_space<vmem>>, vector<16x16xbf16>
    %c0_17 = arith.constant 0 : index
    %c0_18 = arith.constant 0 : index
    %21 = vector.load %arg7[%c0_17, %c0_18] : memref<320x16xbf16, #tpu.memory_space<vmem>>, vector<320x16xbf16>
    %cst = arith.constant dense<0.000000e+00> : vector<320x16xf32>
    %22 = tpu.matmul %21, %19, %cst {dimension_numbers = #tpu.dot_dimension_numbers<[1], [0], [0], [1], [0, 0, 1, 1], [], []>} : vector<320x16xbf16>, vector<16x16xbf16>, vector<320x16xf32> -> vector<320x16xf32>
    %23 = vector.shape_cast %22 : vector<320x16xf32> to vector<20x16x16xf32>
    %24 = arith.truncf %23 : vector<20x16x16xf32> to vector<20x16x16xbf16>
    %25 = vector.shape_cast %20 : vector<16x16xbf16> to vector<1x16x16xbf16>
    %26 = vector.shape_cast %25 : vector<1x16x16xbf16> to vector<1x16x16xbf16>
    %27 = vector.broadcast %26 : vector<1x16x16xbf16> to vector<20x16x16xbf16>
    %cst_19 = arith.constant dense<0.000000e+00> : vector<20x16x16xf32>
    %28 = tpu.matmul %27, %24, %cst_19 {dimension_numbers = #tpu.dot_dimension_numbers<[2], [1], [1], [2], [0, 0, 0, 1, 1, 2], [0], [0]>} : vector<20x16x16xbf16>, vector<20x16x16xbf16>, vector<20x16x16xf32> -> vector<20x16x16xf32>
    %29 = vector.extract_strided_slice %28 {offsets = [0, 0, 0], sizes = [4, 16, 16], strides = [1, 1, 1]} : vector<20x16x16xf32> to vector<4x16x16xf32>
    %30 = vector.extract_strided_slice %28 {offsets = [4, 0, 0], sizes = [4, 16, 16], strides = [1, 1, 1]} : vector<20x16x16xf32> to vector<4x16x16xf32>
    %31 = vector.extract_strided_slice %28 {offsets = [8, 0, 0], sizes = [4, 16, 16], strides = [1, 1, 1]} : vector<20x16x16xf32> to vector<4x16x16xf32>
    %32 = vector.extract_strided_slice %28 {offsets = [12, 0, 0], sizes = [4, 16, 16], strides = [1, 1, 1]} : vector<20x16x16xf32> to vector<4x16x16xf32>
    %33 = vector.extract_strided_slice %28 {offsets = [16, 0, 0], sizes = [4, 16, 16], strides = [1, 1, 1]} : vector<20x16x16xf32> to vector<4x16x16xf32>
    %34 = arith.mulf %29, %29 : vector<4x16x16xf32>
    %35 = arith.mulf %30, %30 : vector<4x16x16xf32>
    %36 = arith.mulf %29, %30 : vector<4x16x16xf32>
    %37 = arith.subf %31, %34 : vector<4x16x16xf32>
    %38 = arith.subf %32, %35 : vector<4x16x16xf32>
    %39 = arith.subf %33, %36 : vector<4x16x16xf32>
    %cst_20 = arith.constant 2.000000e+00 : f32
    %40 = vector.broadcast %cst_20 : f32 to vector<4x16x16xf32>
    %41 = arith.mulf %40, %36 : vector<4x16x16xf32>
    %cst_21 = arith.constant 9.99999974E-5 : f32
    %42 = vector.broadcast %cst_21 : f32 to vector<4x16x16xf32>
    %43 = arith.addf %41, %42 : vector<4x16x16xf32>
    %cst_22 = arith.constant 2.000000e+00 : f32
    %44 = vector.broadcast %cst_22 : f32 to vector<4x16x16xf32>
    %45 = arith.mulf %44, %39 : vector<4x16x16xf32>
    %cst_23 = arith.constant 8.99999984E-4 : f32
    %46 = vector.broadcast %cst_23 : f32 to vector<4x16x16xf32>
    %47 = arith.addf %45, %46 : vector<4x16x16xf32>
    %48 = arith.mulf %43, %47 : vector<4x16x16xf32>
    %49 = arith.addf %34, %35 : vector<4x16x16xf32>
    %cst_24 = arith.constant 9.99999974E-5 : f32
    %50 = vector.broadcast %cst_24 : f32 to vector<4x16x16xf32>
    %51 = arith.addf %49, %50 : vector<4x16x16xf32>
    %52 = arith.addf %37, %38 : vector<4x16x16xf32>
    %cst_25 = arith.constant 8.99999984E-4 : f32
    %53 = vector.broadcast %cst_25 : f32 to vector<4x16x16xf32>
    %54 = arith.addf %52, %53 : vector<4x16x16xf32>
    %55 = arith.mulf %51, %54 : vector<4x16x16xf32>
    %56 = tpu.reciprocal %55 {approx = true} : vector<4x16x16xf32> -> vector<4x16x16xf32>
    %57 = arith.mulf %48, %56 : vector<4x16x16xf32>
    %cst_26 = arith.constant 1.000000e+00 : f32
    %58 = vector.broadcast %cst_26 : f32 to vector<1x1xf32>
    %59 = vector.shape_cast %57 : vector<4x16x16xf32> to vector<1x4x16x16xf32>
    %cst_27 = arith.constant dense<0.000000e+00> : vector<1xf32>
    %60 = vector.multi_reduction <add>, %59, %cst_27 [1, 2, 3] : vector<1x4x16x16xf32> to vector<1xf32>
    %61 = vector.shape_cast %60 : vector<1xf32> to vector<1x1x1x1xf32>
    %62 = vector.extract %61[0, 0, 0, 0] : f32 from vector<1x1x1x1xf32>
    %63 = vector.broadcast %62 : f32 to vector<1x1xf32>
    %64 = arith.mulf %58, %63 : vector<1x1xf32>
    %c0_28 = arith.constant 0 : index
    %c0_29 = arith.constant 0 : index
    %c0_30 = arith.constant 0 : index
    %c0_31 = arith.constant 0 : index
    %65 = vector.load %arg6[%c0_28, %c0_29, %c0_30, %c0_31] : memref<1x1x1x1xf32, #tpu.memory_space<vmem>>, vector<1x1x1x1xf32>
    %66 = vector.shape_cast %65 : vector<1x1x1x1xf32> to vector<1x1xf32>
    %67 = vector.shape_cast %64 : vector<1x1xf32> to vector<1x1x1x1xf32>
    tpu.vector_store %arg6[%c0_28, %c0_29, %c0_30, %c0_31], %67 {strides = array<i32>} : memref<1x1x1x1xf32, #tpu.memory_space<vmem>>, vector<1x1x1x1xf32>,
    return
  }
  func.func @transform_0(%arg0: i32, %arg1: i32) -> (i32, i32, i32, i32) {
    %c0_i32 = arith.constant 0 : i32
    %c0_i32_0 = arith.constant 0 : i32
    %c0_i32_1 = arith.constant 0 : i32
    return %arg0, %arg1, %c0_i32, %c0_i32_0 : i32, i32, i32, i32
  }
  func.func @transform_1(%arg0: i32, %arg1: i32) -> (i32, i32, i32, i32) {
    %c0_i32 = arith.constant 0 : i32
    %c0_i32_0 = arith.constant 0 : i32
    %c0_i32_1 = arith.constant 0 : i32
    return %arg0, %arg1, %c0_i32, %c0_i32_0 : i32, i32, i32, i32
  }
  func.func @transform_2(%arg0: i32, %arg1: i32) -> (i32, i32) {
    %c0_i32 = arith.constant 0 : i32
    %c0_i32_0 = arith.constant 0 : i32
    %c0_i32_1 = arith.constant 0 : i32
    return %c0_i32, %c0_i32_0 : i32, i32
  }
  func.func @transform_3(%arg0: i32, %arg1: i32) -> (i32, i32) {
    %c0_i32 = arith.constant 0 : i32
    %c0_i32_0 = arith.constant 0 : i32
    %c0_i32_1 = arith.constant 0 : i32
    return %c0_i32, %c0_i32_0 : i32, i32
  }
  func.func @transform_4(%arg0: i32, %arg1: i32) -> (i32, i32, i32, i32) {
    %c0_i32 = arith.constant 0 : i32
    %c0_i32_0 = arith.constant 0 : i32
    %c0_i32_1 = arith.constant 0 : i32
    return %arg0, %arg1, %c0_i32, %c0_i32_0 : i32, i32, i32, i32
  }
}

</mosaic_0001>

<llo_original>
// kernel: tpu_custom_call.1
$region0: #{tpu_custom_call.1}
  #allocation0 [shape = 'u32[]', space=smem, size = 0x4, offset = 0x4, fixed_abs, tag = 'smem constant byte address 0x4 - core index']
  #allocation1 [shape = 'u32[144,128]{1,0:T(1,128)}', space=vmem, size = 0x12000, scoped, tag = 'internal scratch']
  #allocation2 [shape = 'bf16[320,16]{1,0:T(8,128)(2,1)}', space=vmem, size = 0x14000, scoped, tag = 'scratch operand']
  %s0 = inlined_call_operand.hbm [shape: f32[2,4,16,16], index: 0, kind: input, shape index: {}]
  %s1 = inlined_call_operand.hbm [shape: f32[2,4,16,16], index: 1, kind: input, shape index: {}]
  %s2 = inlined_call_operand.hbm [shape: bf16[16,16], index: 2, kind: input, shape index: {}]
  %s3 = inlined_call_operand.hbm [shape: bf16[16,16], index: 3, kind: input, shape index: {}]
  %s4 = inlined_call_operand.vmem [shape: f32[2,1,1,1], index: 4, kind: output, shape index: {}]
  %s5 = sld [smem:[#allocation0]]
  $region65: #{tpu_custom_call.1} parent=0
    _
  %s7 = ssub.s32 1, %s5
  %s8 = scalar_select 0, %s7, %s5
  $region1: #{tpu_custom_call.1} parent=0
    #allocation3 [shape = 'u8[65536]{0}', space=vmem, size = 0x10000, scoped, tag = 'input window, operand 0']
    #allocation4 [shape = 's32[2]{0}', space=sflag, size = 0x8, scoped, tag = 'scoped memory for tpu_custom_call.1']
    #allocation5 [shape = 'u8[65536]{0}', space=vmem, size = 0x10000, scoped, tag = 'input window, operand 1']
    #allocation6 [shape = 's32[2]{0}', space=sflag, size = 0x8, scoped, tag = 'scoped memory for tpu_custom_call.1']
    #allocation7 [shape = 'u8[4096]{0}', space=vmem, size = 0x1000, scoped, tag = 'input window, operand 2, single buffered']
    #allocation8 [shape = 'u8[4096]{0}', space=vmem, size = 0x1000, scoped, tag = 'input window, operand 3, single buffered']
    #allocation9 [shape = 's32[1]{0}', space=sflag, size = 0x4, scoped, tag = 'scoped memory for tpu_custom_call.1']
    %9 = vsyncpa [#allocation4], 0
    %s10 = scalar_lea.sflag [#allocation4], 1
    %11 = vsyncpa %s10, 0
    %12 = vsyncpa [#allocation6], 0
    %s13 = scalar_lea.sflag [#allocation6], 1
    %14 = vsyncpa %s13, 0
    %15 = vsyncpa [#allocation9], 0
    loop: start=0, step=1, limit=4
    $region2: #{tpu_custom_call.1} parent=1 // loop_pre_header
      _
    $region3: #{tpu_custom_call.1} parent=1 // loop_header
      %s17 = sphi 0, %s21
      %p18 = scmp.ge.s32.totalorder %s17, 4
      %s24 = sphi 0, %s36
      %s25 = sphi 0, %s32
      %s26 = sphi 0, %s24
      %s27 = sphi 0, %s25
      %s28 = sphi 0, %s26
      %s29 = sphi 0, %s27
      %s41 = sphi 0, %s43
      %s44 = sphi 0, %s41
      %s45 = sphi 0, %s44
      %s61 = sphi 0, %s45
      %s69 = sphi 0, %s71
      %s72 = sphi 0, %s69
      %s73 = sphi 0, %s72
      %s89 = sphi 0, %s73
      %s93 = sphi 0, %s93
      %s95 = sphi 0, %s93
      %s96 = sphi 0, %s95
      %s110 = sphi 0, %s96
      %s114 = sphi 0, %s114
      %s116 = sphi 0, %s114
      %s117 = sphi 0, %s116
      %s131 = sphi 0, %s117
      %s139 = sphi 0, %s141
      %s142 = sphi 0, %s139
      %s143 = sphi 0, %s142
      %s159 = sphi 0, %s143
    $region4: #{tpu_custom_call.1} parent=1 // loop_header_branch
      %20 = sbr.rel (%p18) target = $region8
    $region5: #{tpu_custom_call.1} parent=1 // loop_body
      %s22 = ssub.s32 %s17, 1
      %s23 = ssub.s32 %s17, 2
      %s30 = sadd.s32 1, %s25
      %p31 = scmp.ge.s32.totalorder %s30, 1
      %s32 = scalar_select %p31, 0, %s30
      %s33 = sadd.s32 1, %s24
      %s34 = scalar_select %p31, %s33, %s24
      %p35 = scmp.ge.s32.totalorder %s34, 2
      %s36 = scalar_select %p35, 0, %s34
      %s37 = ssub.s32 %s24, %s36
      %s38 = ssub.s32 %s25, %s32
      %s39 = sor.u32 %s37, %s38
      %p40 = scmp.eq.s32.totalorder %s39, 0
      %s42 = sadd.s32 %s41, 1
      %s43 = scalar_select %p40, %s41, %s42
      %p46 = pneg %p40
      %p47 = scmp.eq.s32.totalorder %s17, 1
      %p48 = por %p46, %p47
      %p49 = scmp.ne.s32.totalorder %s41, %s44
      %p50 = scmp.eq.s32.totalorder %s17, 0
      %p51 = por %p49, %p50
      %p52 = scmp.ne.s32.totalorder %s41, %s44
      %p53 = scmp.eq.s32.totalorder %s22, 1
      %p54 = por %p52, %p53
      %p55 = scmp.ne.s32.totalorder %s44, %s45
      %p56 = scmp.eq.s32.totalorder %s22, 0
      %p57 = por %p55, %p56
      %p58 = scmp.ne.s32.totalorder %s44, %s45
      %p59 = scmp.eq.s32.totalorder %s23, 1
      %p60 = por %p58, %p59
      %p62 = scmp.ne.s32.totalorder %s45, %s61
      %p63 = scmp.eq.s32.totalorder %s23, 0
      %p64 = por %p62, %p63
      %s65 = ssub.s32 %s24, %s36
      %s66 = ssub.s32 %s25, %s32
      %s67 = sor.u32 %s65, %s66
      %p68 = scmp.eq.s32.totalorder %s67, 0
      %s70 = sadd.s32 %s69, 1
      %s71 = scalar_select %p68, %s69, %s70
      %p74 = pneg %p68
      %p75 = scmp.eq.s32.totalorder %s17, 1
      %p76 = por %p74, %p75
      %p77 = scmp.ne.s32.totalorder %s69, %s72
      %p78 = scmp.eq.s32.totalorder %s17, 0
      %p79 = por %p77, %p78
      %p80 = scmp.ne.s32.totalorder %s69, %s72
      %p81 = scmp.eq.s32.totalorder %s22, 1
      %p82 = por %p80, %p81
      %p83 = scmp.ne.s32.totalorder %s72, %s73
      %p84 = scmp.eq.s32.totalorder %s22, 0
      %p85 = por %p83, %p84
      %p86 = scmp.ne.s32.totalorder %s72, %s73
      %p87 = scmp.eq.s32.totalorder %s23, 1
      %p88 = por %p86, %p87
      %p90 = scmp.ne.s32.totalorder %s73, %s89
      %p91 = scmp.eq.s32.totalorder %s23, 0
      %p92 = por %p90, %p91
      %s94 = sadd.s32 %s93, 1
      %p97 = scmp.eq.s32.totalorder %s17, 1
      %p98 = scmp.ne.s32.totalorder %s93, %s95
      %p99 = scmp.eq.s32.totalorder %s17, 0
      %p100 = por %p98, %p99
      %p101 = scmp.ne.s32.totalorder %s93, %s95
      %p102 = scmp.eq.s32.totalorder %s22, 1
      %p103 = por %p101, %p102
      %p104 = scmp.ne.s32.totalorder %s95, %s96
      %p105 = scmp.eq.s32.totalorder %s22, 0
      %p106 = por %p104, %p105
      %p107 = scmp.ne.s32.totalorder %s95, %s96
      %p108 = scmp.eq.s32.totalorder %s23, 1
      %p109 = por %p107, %p108
      %p111 = scmp.ne.s32.totalorder %s96, %s110
      %p112 = scmp.eq.s32.totalorder %s23, 0
      %p113 = por %p111, %p112
      %s115 = sadd.s32 %s114, 1
      %p118 = scmp.eq.s32.totalorder %s17, 1
      %p119 = scmp.ne.s32.totalorder %s114, %s116
      %p120 = scmp.eq.s32.totalorder %s17, 0
      %p121 = por %p119, %p120
      %p122 = scmp.ne.s32.totalorder %s114, %s116
      %p123 = scmp.eq.s32.totalorder %s22, 1
      %p124 = por %p122, %p123
      %p125 = scmp.ne.s32.totalorder %s116, %s117
      %p126 = scmp.eq.s32.totalorder %s22, 0
      %p127 = por %p125, %p126
      %p128 = scmp.ne.s32.totalorder %s116, %s117
      %p129 = scmp.eq.s32.totalorder %s23, 1
      %p130 = por %p128, %p129
      %p132 = scmp.ne.s32.totalorder %s117, %s131
      %p133 = scmp.eq.s32.totalorder %s23, 0
      %p134 = por %p132, %p133
      %s135 = ssub.s32 %s24, %s36
      %s136 = ssub.s32 %s25, %s32
      %s137 = sor.u32 %s135, %s136
      %p138 = scmp.eq.s32.totalorder %s137, 0
      %s140 = sadd.s32 %s139, 1
      %s141 = scalar_select %p138, %s139, %s140
      %p144 = pneg %p138
      %p145 = scmp.eq.s32.totalorder %s17, 1
      %p146 = por %p144, %p145
      %p147 = scmp.ne.s32.totalorder %s139, %s142
      %p148 = scmp.eq.s32.totalorder %s17, 0
      %p149 = por %p147, %p148
      %p150 = scmp.ne.s32.totalorder %s139, %s142
      %p151 = scmp.eq.s32.totalorder %s22, 1
      %p152 = por %p150, %p151
      %p153 = scmp.ne.s32.totalorder %s142, %s143
      %p154 = scmp.eq.s32.totalorder %s22, 0
      %p155 = por %p153, %p154
      %p156 = scmp.ne.s32.totalorder %s142, %s143
      %p157 = scmp.eq.s32.totalorder %s23, 1
      %p158 = por %p156, %p157
      %p160 = scmp.ne.s32.totalorder %s143, %s159
      %p161 = scmp.eq.s32.totalorder %s23, 0
      %p162 = por %p160, %p161
      %p163 = scmp.le.s32.totalorder 1, %s17
      %p164 = scmp.lt.s32.totalorder %s17, 3
      %p165 = pnand %p163, %p164
      %p166 = pneg %p165
      // Predicated region
      $region9: #{tpu_custom_call.1} parent=5 // pred_check
        _
      $region10: #{tpu_custom_call.1} parent=5 // pred_check_branch
        %168 = sbr.rel (%p165) target = $region12
      $region11: #{tpu_custom_call.1} parent=5 // pred_region
        %s169 = ssub.s32 %s17, 1
        // Predicated region
        $region13: #{tpu_custom_call.1} parent=11 // pred_check
          %p170 = pneg %p106
        $region14: #{tpu_custom_call.1} parent=11 // pred_check_branch
          %172 = sbr.rel (%p170) target = $region16
        $region15: #{tpu_custom_call.1} parent=11 // pred_region
          %s174 = ssub.s32 128, 128
          %175 = vsyncadd [#allocation6], %s174
          %s176 = sshll.u32 [#allocation7], 4
          %s177 = int_to_ptr.vmem [resolvable:$true] %s176
          %182 = dma.hbm_to_vmem [thread:$0]  %s2, 128, %s177, [#allocation6], 64, 64, 4
        $region16: #{tpu_custom_call.1} parent=11 // pred_fallthru
          _
        // Predicated region
        $region17: #{tpu_custom_call.1} parent=11 // pred_check
          %p183 = pneg %p127
        $region18: #{tpu_custom_call.1} parent=11 // pred_check_branch
          %185 = sbr.rel (%p183) target = $region20
        $region19: #{tpu_custom_call.1} parent=11 // pred_region
          %s187 = ssub.s32 128, 128
          %188 = vsyncadd [#allocation9], %s187
          %s189 = sshll.u32 [#allocation8], 4
          %s190 = int_to_ptr.vmem [resolvable:$true] %s189
          %195 = dma.hbm_to_vmem [thread:$0]  %s3, 128, %s190, [#allocation9], 64, 64, 4
        $region20: #{tpu_custom_call.1} parent=11 // pred_fallthru
          _
      $region12: #{tpu_custom_call.1} parent=5 // pred_fallthru
        _
      %p196 = scmp.lt.s32.totalorder %s17, 2
      // Predicated region
      $region21: #{tpu_custom_call.1} parent=5 // pred_check
        %p197 = pneg %p196
      $region22: #{tpu_custom_call.1} parent=5 // pred_check_branch
        %199 = sbr.rel (%p197) target = $region24
      $region23: #{tpu_custom_call.1} parent=5 // pred_region
        // Predicated region
        $region25: #{tpu_custom_call.1} parent=23 // pred_check
          %p200 = pneg %p51
        $region26: #{tpu_custom_call.1} parent=23 // pred_check_branch
          %202 = sbr.rel (%p200) target = $region28
        $region27: #{tpu_custom_call.1} parent=23 // pred_region
          %s203 = sand.u32 %s41, 1
          %s204 = scalar_lea.sflag [#allocation4], %s203
          %s205 = sand.u32 %s41, 1
          %s206 = smul.addr %s205, 64
          %s207 = scalar_lea.vmem [#allocation3], %s206
          %s208 = smul.u32 4, %s25
          %s210 = ssub.s32 1024, 1024
          %211 = vsyncadd %s204, %s210
          %s212 = smul.addr %s208, 2
          %s213 = smul.addr %s24, 8
          %s214 = sadd.s32 %s212, %s213
          %s215 = smul.addr %s214, 128
          %s216 = scalar_lea.hbm %s0, %s215
          %s217 = sshll.u32 %s207, 4
          %s218 = int_to_ptr.vmem [resolvable:$true] %s217
          %223 = dma.hbm_to_vmem [thread:$0]  %s216, 1024, %s218, %s204, 128, 128, 8
        $region28: #{tpu_custom_call.1} parent=23 // pred_fallthru
          _
        // Predicated region
        $region29: #{tpu_custom_call.1} parent=23 // pred_check
          %p224 = pneg %p79
        $region30: #{tpu_custom_call.1} parent=23 // pred_check_branch
          %226 = sbr.rel (%p224) target = $region32
        $region31: #{tpu_custom_call.1} parent=23 // pred_region
          %s227 = sand.u32 %s17, 1
          %s228 = scalar_lea.sflag [#allocation6], %s227
          %s229 = sand.u32 %s69, 1
          %s230 = smul.addr %s229, 64
          %s231 = scalar_lea.vmem [#allocation5], %s230
          %s232 = smul.u32 4, %s25
          %s234 = ssub.s32 1024, 1024
          %235 = vsyncadd %s228, %s234
          %s236 = smul.addr %s232, 2
          %s237 = smul.addr %s24, 8
          %s238 = sadd.s32 %s236, %s237
          %s239 = smul.addr %s238, 128
          %s240 = scalar_lea.hbm %s1, %s239
          %s241 = sshll.u32 %s231, 4
          %s242 = int_to_ptr.vmem [resolvable:$true] %s241
          %247 = dma.hbm_to_vmem [thread:$0]  %s240, 1024, %s242, %s228, 128, 128, 8
        $region32: #{tpu_custom_call.1} parent=23 // pred_fallthru
          _
      $region24: #{tpu_custom_call.1} parent=5 // pred_fallthru
        _
      %p248 = scmp.le.s32.totalorder 1, %s17
      %p249 = scmp.lt.s32.totalorder %s17, 3
      %p250 = pnand %p248, %p249
      %p251 = pneg %p250
      // Predicated region
      $region33: #{tpu_custom_call.1} parent=5 // pred_check
        _
      $region34: #{tpu_custom_call.1} parent=5 // pred_check_branch
        %253 = sbr.rel (%p250) target = $region36
      $region35: #{tpu_custom_call.1} parent=5 // pred_region
        %s254 = ssub.s32 %s17, 1
        %s255 = sand.u32 %s44, 1
        %s256 = scalar_lea.sflag [#allocation4], %s255
        %s257 = sand.u32 %s44, 1
        %s258 = smul.addr %s257, 64
        %s259 = scalar_lea.vmem [#allocation3], %s258
        // Predicated region
        $region37: #{tpu_custom_call.1} parent=35 // pred_check
          %p260 = pneg %p57
        $region38: #{tpu_custom_call.1} parent=35 // pred_check_branch
          %262 = sbr.rel (%p260) target = $region40
        $region39: #{tpu_custom_call.1} parent=35 // pred_region
          %263 = dma.done %s256, 1024
        $region40: #{tpu_custom_call.1} parent=35 // pred_fallthru
          _
        %s264 = sand.u32 %s22, 1
        %s265 = scalar_lea.sflag [#allocation6], %s264
        %s266 = sand.u32 %s72, 1
        %s267 = smul.addr %s266, 64
        %s268 = scalar_lea.vmem [#allocation5], %s267
        // Predicated region
        $region41: #{tpu_custom_call.1} parent=35 // pred_check
          %p269 = pneg %p85
        $region42: #{tpu_custom_call.1} parent=35 // pred_check_branch
          %271 = sbr.rel (%p269) target = $region44
        $region43: #{tpu_custom_call.1} parent=35 // pred_region
          %272 = dma.done %s265, 1024
        $region44: #{tpu_custom_call.1} parent=35 // pred_fallthru
          _
        // Predicated region
        $region45: #{tpu_custom_call.1} parent=35 // pred_check
          %p273 = pneg %p106
        $region46: #{tpu_custom_call.1} parent=35 // pred_check_branch
          %275 = sbr.rel (%p273) target = $region48
        $region47: #{tpu_custom_call.1} parent=35 // pred_region
          %276 = dma.done [#allocation6], 128
        $region48: #{tpu_custom_call.1} parent=35 // pred_fallthru
          _
        // Predicated region
        $region49: #{tpu_custom_call.1} parent=35 // pred_check
          %p277 = pneg %p127
        $region50: #{tpu_custom_call.1} parent=35 // pred_check_branch
          %279 = sbr.rel (%p277) target = $region52
        $region51: #{tpu_custom_call.1} parent=35 // pred_region
          %280 = dma.done [#allocation9], 128
        $region52: #{tpu_custom_call.1} parent=35 // pred_fallthru
          _
        %s281 = sand.u32 %s44, 1
        %s282 = scalar_lea.sflag [#allocation4], %s281
        %s283 = sand.u32 %s44, 1
        %s284 = smul.addr %s283, 64
        %s285 = scalar_lea.vmem [#allocation3], %s284
        %p286 = pneg %p57
        %p287 = pneg %p54
        %s288 = sand.u32 %s22, 1
        %s289 = scalar_lea.sflag [#allocation6], %s288
        %s290 = sand.u32 %s72, 1
        %s291 = smul.addr %s290, 64
        %s292 = scalar_lea.vmem [#allocation5], %s291
        %p293 = pneg %p85
        %p294 = pneg %p82
        %p295 = pneg %p106
        %p296 = pneg %p103
        %p297 = pneg %p127
        %p298 = pneg %p124
        %p299 = pneg %p155
        %p300 = pneg %p152
        %p301 = scmp.lt.s32.totalorder %s26, 1
        %s302 = scalar_select %p301, %s26, 1
        %p303 = scmp.lt.s32.totalorder %s27, 0
        %s304 = scalar_select %p303, %s27, 0
        %s305 = sadd.s32 %s304, %s302
        %s306 = scalar_lea.vmem %s4, %s305
        %s307 = smul.u32 4, %s27
        %s308 = smul.u32 4, %s27
        %p309 = scmp.lt.s32.totalorder %s26, 1
        %s310 = scalar_select %p309, %s26, 1
        %p311 = scmp.lt.s32.totalorder %s27, 0
        %s312 = scalar_select %p311, %s27, 0
        %s313 = sadd.s32 %s312, %s310
        %s314 = scalar_lea.vmem %s4, %s313
        %v316 = vld [vmem:[%s259] sm:$0xff]
        %v317 = vld [vmem:[%s259 + $0x8] sm:$0xff]
        %v318 = vld [vmem:[%s259 + $0x10] sm:$0xff]
        %v319 = vld [vmem:[%s259 + $0x18] sm:$0xff]
        %v320 = vld [vmem:[%s259 + $0x20] sm:$0xff]
        %v321 = vld [vmem:[%s259 + $0x28] sm:$0xff]
        %v322 = vld [vmem:[%s259 + $0x30] sm:$0xff]
        %v323 = vld [vmem:[%s259 + $0x38] sm:$0xff]
        %v324 = vld [vmem:[%s268] sm:$0xff]
        %v325 = vld [vmem:[%s268 + $0x8] sm:$0xff]
        %v326 = vld [vmem:[%s268 + $0x10] sm:$0xff]
        %v327 = vld [vmem:[%s268 + $0x18] sm:$0xff]
        %v328 = vld [vmem:[%s268 + $0x20] sm:$0xff]
        %v329 = vld [vmem:[%s268 + $0x28] sm:$0xff]
        %v330 = vld [vmem:[%s268 + $0x30] sm:$0xff]
        %v331 = vld [vmem:[%s268 + $0x38] sm:$0xff]
        %v332 = vpack.c.bf16 %v317, %v316
        %v333 = vpack.c.bf16 %v319, %v318
        %v334 = vpack.c.bf16 %v321, %v320
        %v335 = vpack.c.bf16 %v323, %v322
        %v340 = vunpack.c.l.b16 %v332
        %v341 = vunpack.c.h.b16 %v332
        %v342 = vunpack.c.l.b16 %v333
        %v343 = vunpack.c.h.b16 %v333
        %v344 = vunpack.c.l.b16 %v334
        %v345 = vunpack.c.h.b16 %v334
        %v346 = vunpack.c.l.b16 %v335
        %v347 = vunpack.c.h.b16 %v335
        %v348 = vpack.c.b16 %v340, %v340
        %v349 = vpack.c.b16 %v341, %v341
        %v350 = vpack.c.b16 %v342, %v342
        %v351 = vpack.c.b16 %v343, %v343
        %v352 = vpack.c.b16 %v344, %v344
        %v353 = vpack.c.b16 %v345, %v345
        %v354 = vpack.c.b16 %v346, %v346
        %v355 = vpack.c.b16 %v347, %v347
        %vm364 = vcmask 125952
        %365 = vst.msk [vmem:[#allocation2] sm:$0xf] %vm364, %v348
        %366 = vst.msk [vmem:[#allocation2 + $0x4] sm:$0xf] %vm364, %v349
        %367 = vst.msk [vmem:[#allocation2 + $0x8] sm:$0xf] %vm364, %v350
        %368 = vst.msk [vmem:[#allocation2 + $0xc] sm:$0xf] %vm364, %v351
        %369 = vst.msk [vmem:[#allocation2 + $0x10] sm:$0xf] %vm364, %v352
        %370 = vst.msk [vmem:[#allocation2 + $0x14] sm:$0xf] %vm364, %v353
        %371 = vst.msk [vmem:[#allocation2 + $0x18] sm:$0xf] %vm364, %v354
        %372 = vst.msk [vmem:[#allocation2 + $0x1c] sm:$0xf] %vm364, %v355
        %v373 = vpack.c.bf16 %v325, %v324
        %v374 = vpack.c.bf16 %v327, %v326
        %v375 = vpack.c.bf16 %v329, %v328
        %v376 = vpack.c.bf16 %v331, %v330
        %v381 = vunpack.c.l.b16 %v373
        %v382 = vunpack.c.h.b16 %v373
        %v383 = vunpack.c.l.b16 %v374
        %v384 = vunpack.c.h.b16 %v374
        %v385 = vunpack.c.l.b16 %v375
        %v386 = vunpack.c.h.b16 %v375
        %v387 = vunpack.c.l.b16 %v376
        %v388 = vunpack.c.h.b16 %v376
        %v389 = vpack.c.b16 %v381, %v381
        %v390 = vpack.c.b16 %v382, %v382
        %v391 = vpack.c.b16 %v383, %v383
        %v392 = vpack.c.b16 %v384, %v384
        %v393 = vpack.c.b16 %v385, %v385
        %v394 = vpack.c.b16 %v386, %v386
        %v395 = vpack.c.b16 %v387, %v387
        %v396 = vpack.c.b16 %v388, %v388
        %405 = vst.msk [vmem:[#allocation2 + $0x20] sm:$0xf] %vm364, %v389
        %406 = vst.msk [vmem:[#allocation2 + $0x24] sm:$0xf] %vm364, %v390
        %407 = vst.msk [vmem:[#allocation2 + $0x28] sm:$0xf] %vm364, %v391
        %408 = vst.msk [vmem:[#allocation2 + $0x2c] sm:$0xf] %vm364, %v392
        %409 = vst.msk [vmem:[#allocation2 + $0x30] sm:$0xf] %vm364, %v393
        %410 = vst.msk [vmem:[#allocation2 + $0x34] sm:$0xf] %vm364, %v394
        %411 = vst.msk [vmem:[#allocation2 + $0x38] sm:$0xf] %vm364, %v395
        %412 = vst.msk [vmem:[#allocation2 + $0x3c] sm:$0xf] %vm364, %v396
        %v413 = vmul.f32 %v316, %v316
        %v414 = vmul.f32 %v317, %v317
        %v415 = vmul.f32 %v318, %v318
        %v416 = vmul.f32 %v319, %v319
        %v417 = vmul.f32 %v320, %v320
        %v418 = vmul.f32 %v321, %v321
        %v419 = vmul.f32 %v322, %v322
        %v420 = vmul.f32 %v323, %v323
        %v421 = vpack.c.bf16 %v414, %v413
        %v422 = vpack.c.bf16 %v416, %v415
        %v423 = vpack.c.bf16 %v418, %v417
        %v424 = vpack.c.bf16 %v420, %v419
        %v429 = vunpack.c.l.b16 %v421
        %v430 = vunpack.c.h.b16 %v421
        %v431 = vunpack.c.l.b16 %v422
        %v432 = vunpack.c.h.b16 %v422
        %v433 = vunpack.c.l.b16 %v423
        %v434 = vunpack.c.h.b16 %v423
        %v435 = vunpack.c.l.b16 %v424
        %v436 = vunpack.c.h.b16 %v424
        %v437 = vpack.c.b16 %v429, %v429
        %v438 = vpack.c.b16 %v430, %v430
        %v439 = vpack.c.b16 %v431, %v431
        %v440 = vpack.c.b16 %v432, %v432
        %v441 = vpack.c.b16 %v433, %v433
        %v442 = vpack.c.b16 %v434, %v434
        %v443 = vpack.c.b16 %v435, %v435
        %v444 = vpack.c.b16 %v436, %v436
        %453 = vst.msk [vmem:[#allocation2 + $0x40] sm:$0xf] %vm364, %v437
        %454 = vst.msk [vmem:[#allocation2 + $0x44] sm:$0xf] %vm364, %v438
        %455 = vst.msk [vmem:[#allocation2 + $0x48] sm:$0xf] %vm364, %v439
        %456 = vst.msk [vmem:[#allocation2 + $0x4c] sm:$0xf] %vm364, %v440
        %457 = vst.msk [vmem:[#allocation2 + $0x50] sm:$0xf] %vm364, %v441
        %458 = vst.msk [vmem:[#allocation2 + $0x54] sm:$0xf] %vm364, %v442
        %459 = vst.msk [vmem:[#allocation2 + $0x58] sm:$0xf] %vm364, %v443
        %460 = vst.msk [vmem:[#allocation2 + $0x5c] sm:$0xf] %vm364, %v444
        %v461 = vmul.f32 %v324, %v324
        %v462 = vmul.f32 %v325, %v325
        %v463 = vmul.f32 %v326, %v326
        %v464 = vmul.f32 %v327, %v327
        %v465 = vmul.f32 %v328, %v328
        %v466 = vmul.f32 %v329, %v329
        %v467 = vmul.f32 %v330, %v330
        %v468 = vmul.f32 %v331, %v331
        %v469 = vpack.c.bf16 %v462, %v461
        %v470 = vpack.c.bf16 %v464, %v463
        %v471 = vpack.c.bf16 %v466, %v465
        %v472 = vpack.c.bf16 %v468, %v467
        %v477 = vunpack.c.l.b16 %v469
        %v478 = vunpack.c.h.b16 %v469
        %v479 = vunpack.c.l.b16 %v470
        %v480 = vunpack.c.h.b16 %v470
        %v481 = vunpack.c.l.b16 %v471
        %v482 = vunpack.c.h.b16 %v471
        %v483 = vunpack.c.l.b16 %v472
        %v484 = vunpack.c.h.b16 %v472
        %v485 = vpack.c.b16 %v477, %v477
        %v486 = vpack.c.b16 %v478, %v478
        %v487 = vpack.c.b16 %v479, %v479
        %v488 = vpack.c.b16 %v480, %v480
        %v489 = vpack.c.b16 %v481, %v481
        %v490 = vpack.c.b16 %v482, %v482
        %v491 = vpack.c.b16 %v483, %v483
        %v492 = vpack.c.b16 %v484, %v484
        %501 = vst.msk [vmem:[#allocation2 + $0x60] sm:$0xf] %vm364, %v485
        %502 = vst.msk [vmem:[#allocation2 + $0x64] sm:$0xf] %vm364, %v486
        %503 = vst.msk [vmem:[#allocation2 + $0x68] sm:$0xf] %vm364, %v487
        %504 = vst.msk [vmem:[#allocation2 + $0x6c] sm:$0xf] %vm364, %v488
        %505 = vst.msk [vmem:[#allocation2 + $0x70] sm:$0xf] %vm364, %v489
        %506 = vst.msk [vmem:[#allocation2 + $0x74] sm:$0xf] %vm364, %v490
        %507 = vst.msk [vmem:[#allocation2 + $0x78] sm:$0xf] %vm364, %v491
        %508 = vst.msk [vmem:[#allocation2 + $0x7c] sm:$0xf] %vm364, %v492
        %v509 = vmul.f32 %v316, %v324
        %v510 = vmul.f32 %v317, %v325
        %v511 = vmul.f32 %v318, %v326
        %v512 = vmul.f32 %v319, %v327
        %v513 = vmul.f32 %v320, %v328
        %v514 = vmul.f32 %v321, %v329
        %v515 = vmul.f32 %v322, %v330
        %v516 = vmul.f32 %v323, %v331
        %v517 = vpack.c.bf16 %v510, %v509
        %v518 = vpack.c.bf16 %v512, %v511
        %v519 = vpack.c.bf16 %v514, %v513
        %v520 = vpack.c.bf16 %v516, %v515
        %v525 = vunpack.c.l.b16 %v517
        %v526 = vunpack.c.h.b16 %v517
        %v527 = vunpack.c.l.b16 %v518
        %v528 = vunpack.c.h.b16 %v518
        %v529 = vunpack.c.l.b16 %v519
        %v530 = vunpack.c.h.b16 %v519
        %v531 = vunpack.c.l.b16 %v520
        %v532 = vunpack.c.h.b16 %v520
        %v533 = vpack.c.b16 %v525, %v525
        %v534 = vpack.c.b16 %v526, %v526
        %v535 = vpack.c.b16 %v527, %v527
        %v536 = vpack.c.b16 %v528, %v528
        %v537 = vpack.c.b16 %v529, %v529
        %v538 = vpack.c.b16 %v530, %v530
        %v539 = vpack.c.b16 %v531, %v531
        %v540 = vpack.c.b16 %v532, %v532
        %549 = vst.msk [vmem:[#allocation2 + $0x80] sm:$0xf] %vm364, %v533
        %550 = vst.msk [vmem:[#allocation2 + $0x84] sm:$0xf] %vm364, %v534
        %551 = vst.msk [vmem:[#allocation2 + $0x88] sm:$0xf] %vm364, %v535
        %552 = vst.msk [vmem:[#allocation2 + $0x8c] sm:$0xf] %vm364, %v536
        %553 = vst.msk [vmem:[#allocation2 + $0x90] sm:$0xf] %vm364, %v537
        %554 = vst.msk [vmem:[#allocation2 + $0x94] sm:$0xf] %vm364, %v538
        %555 = vst.msk [vmem:[#allocation2 + $0x98] sm:$0xf] %vm364, %v539
        %556 = vst.msk [vmem:[#allocation2 + $0x9c] sm:$0xf] %vm364, %v540
        %v557 = vld [vmem:[#allocation7] sm:$0xf]
        %v558 = vld [vmem:[#allocation7 + $0x4] sm:$0xf]
        %v559 = vld [vmem:[#allocation8] sm:$0xf]
        %v560 = vld [vmem:[#allocation8 + $0x4] sm:$0xf]
        %v561 = vld [vmem:[#allocation2] sm:$0xf]
        %v562 = vld [vmem:[#allocation2 + $0x4] sm:$0xf]
        %v563 = vld [vmem:[#allocation2 + $0x8] sm:$0xf]
        %v564 = vld [vmem:[#allocation2 + $0xc] sm:$0xf]
        %v565 = vld [vmem:[#allocation2 + $0x10] sm:$0xf]
        %v566 = vld [vmem:[#allocation2 + $0x14] sm:$0xf]
        %v567 = vld [vmem:[#allocation2 + $0x18] sm:$0xf]
        %v568 = vld [vmem:[#allocation2 + $0x1c] sm:$0xf]
        %v569 = vld [vmem:[#allocation2 + $0x20] sm:$0xf]
        %v570 = vld [vmem:[#allocation2 + $0x24] sm:$0xf]
        %v571 = vld [vmem:[#allocation2 + $0x28] sm:$0xf]
        %v572 = vld [vmem:[#allocation2 + $0x2c] sm:$0xf]
        %v573 = vld [vmem:[#allocation2 + $0x30] sm:$0xf]
        %v574 = vld [vmem:[#allocation2 + $0x34] sm:$0xf]
        %v575 = vld [vmem:[#allocation2 + $0x38] sm:$0xf]
        %v576 = vld [vmem:[#allocation2 + $0x3c] sm:$0xf]
        %v577 = vld [vmem:[#allocation2 + $0x40] sm:$0xf]
        %v578 = vld [vmem:[#allocation2 + $0x44] sm:$0xf]
        %v579 = vld [vmem:[#allocation2 + $0x48] sm:$0xf]
        %v580 = vld [vmem:[#allocation2 + $0x4c] sm:$0xf]
        %v581 = vld [vmem:[#allocation2 + $0x50] sm:$0xf]
        %v582 = vld [vmem:[#allocation2 + $0x54] sm:$0xf]
        %v583 = vld [vmem:[#allocation2 + $0x58] sm:$0xf]
        %v584 = vld [vmem:[#allocation2 + $0x5c] sm:$0xf]
        %v585 = vld [vmem:[#allocation2 + $0x60] sm:$0xf]
        %v586 = vld [vmem:[#allocation2 + $0x64] sm:$0xf]
        %v587 = vld [vmem:[#allocation2 + $0x68] sm:$0xf]
        %v588 = vld [vmem:[#allocation2 + $0x6c] sm:$0xf]
        %v589 = vld [vmem:[#allocation2 + $0x70] sm:$0xf]
        %v590 = vld [vmem:[#allocation2 + $0x74] sm:$0xf]
        %v591 = vld [vmem:[#allocation2 + $0x78] sm:$0xf]
        %v592 = vld [vmem:[#allocation2 + $0x7c] sm:$0xf]
        %v593 = vld [vmem:[#allocation2 + $0x80] sm:$0xf]
        %v594 = vld [vmem:[#allocation2 + $0x84] sm:$0xf]
        %v595 = vld [vmem:[#allocation2 + $0x88] sm:$0xf]
        %v596 = vld [vmem:[#allocation2 + $0x8c] sm:$0xf]
        %v597 = vld [vmem:[#allocation2 + $0x90] sm:$0xf]
        %v598 = vld [vmem:[#allocation2 + $0x94] sm:$0xf]
        %v599 = vld [vmem:[#allocation2 + $0x98] sm:$0xf]
        %v600 = vld [vmem:[#allocation2 + $0x9c] sm:$0xf]
        %v641 = vunpack.c.l.b16 %v561
        %v642 = vunpack.c.l.b16 %v562
        %v643 = vunpack.c.l.b16 %v563
        %v644 = vunpack.c.l.b16 %v564
        %v645 = vunpack.c.l.b16 %v565
        %v646 = vunpack.c.l.b16 %v566
        %v647 = vunpack.c.l.b16 %v567
        %v648 = vunpack.c.l.b16 %v568
        %v649 = vunpack.c.l.b16 %v569
        %v650 = vunpack.c.l.b16 %v570
        %v651 = vunpack.c.l.b16 %v571
        %v652 = vunpack.c.l.b16 %v572
        %v653 = vunpack.c.l.b16 %v573
        %v654 = vunpack.c.l.b16 %v574
        %v655 = vunpack.c.l.b16 %v575
        %v656 = vunpack.c.l.b16 %v576
        %v657 = vunpack.c.l.b16 %v577
        %v658 = vunpack.c.l.b16 %v578
        %v659 = vunpack.c.l.b16 %v579
        %v660 = vunpack.c.l.b16 %v580
        %v661 = vunpack.c.l.b16 %v581
        %v662 = vunpack.c.l.b16 %v582
        %v663 = vunpack.c.l.b16 %v583
        %v664 = vunpack.c.l.b16 %v584
        %v665 = vunpack.c.l.b16 %v585
        %v666 = vunpack.c.l.b16 %v586
        %v667 = vunpack.c.l.b16 %v587
        %v668 = vunpack.c.l.b16 %v588
        %v669 = vunpack.c.l.b16 %v589
        %v670 = vunpack.c.l.b16 %v590
        %v671 = vunpack.c.l.b16 %v591
        %v672 = vunpack.c.l.b16 %v592
        %v673 = vunpack.c.l.b16 %v593
        %v674 = vunpack.c.l.b16 %v594
        %v675 = vunpack.c.l.b16 %v595
        %v676 = vunpack.c.l.b16 %v596
        %v677 = vunpack.c.l.b16 %v597
        %v678 = vunpack.c.l.b16 %v598
        %v679 = vunpack.c.l.b16 %v599
        %v680 = vunpack.c.l.b16 %v600
        %v681 = vpack.c.b16 %v642, %v641
        %v682 = vpack.c.b16 %v644, %v643
        %v683 = vpack.c.b16 %v646, %v645
        %v684 = vpack.c.b16 %v648, %v647
        %v685 = vpack.c.b16 %v650, %v649
        %v686 = vpack.c.b16 %v652, %v651
        %v687 = vpack.c.b16 %v654, %v653
        %v688 = vpack.c.b16 %v656, %v655
        %v689 = vpack.c.b16 %v658, %v657
        %v690 = vpack.c.b16 %v660, %v659
        %v691 = vpack.c.b16 %v662, %v661
        %v692 = vpack.c.b16 %v664, %v663
        %v693 = vpack.c.b16 %v666, %v665
        %v694 = vpack.c.b16 %v668, %v667
        %v695 = vpack.c.b16 %v670, %v669
        %v696 = vpack.c.b16 %v672, %v671
        %v697 = vpack.c.b16 %v674, %v673
        %v698 = vpack.c.b16 %v676, %v675
        %v699 = vpack.c.b16 %v678, %v677
        %v700 = vpack.c.b16 %v680, %v679
        %v703 = vunpack.c.l.b16 %v557
        %v704 = vunpack.c.l.b16 %v558
        %v705 = vpack.c.b16 %v704, %v703
        %vm707 = vcmask 130048
        %v709 = vsel %vm707, %v681, 0
        %v712 = vsel %vm707, %v682, 0
        %v715 = vsel %vm707, %v683, 0
        %v718 = vsel %vm707, %v684, 0
        %v721 = vsel %vm707, %v685, 0
        %v724 = vsel %vm707, %v686, 0
        %v727 = vsel %vm707, %v687, 0
        %v730 = vsel %vm707, %v688, 0
        %v733 = vsel %vm707, %v689, 0
        %v736 = vsel %vm707, %v690, 0
        %v739 = vsel %vm707, %v691, 0
        %v742 = vsel %vm707, %v692, 0
        %v745 = vsel %vm707, %v693, 0
        %v748 = vsel %vm707, %v694, 0
        %v751 = vsel %vm707, %v695, 0
        %v754 = vsel %vm707, %v696, 0
        %v757 = vsel %vm707, %v697, 0
        %v760 = vsel %vm707, %v698, 0
        %v763 = vsel %vm707, %v699, 0
        %v766 = vsel %vm707, %v700, 0
        %768 = vmatprep.subr.bf16.mxu0 0
        %769 = vmatpush1.bf16.msra.mxu0 0
        %770 = vmatprep.subr.bf16.mxu0 0
        %771 = vmatpush1.bf16.msra.mxu0 0
        %772 = vmatprep.subr.bf16.mxu0 0
        %773 = vmatpush1.bf16.msra.mxu0 0
        %774 = vmatprep.subr.bf16.mxu0 0
        %775 = vmatpush1.bf16.msra.mxu0 0
        %776 = vmatprep.subr.bf16.mxu0 0
        %777 = vmatpush1.bf16.msra.mxu0 0
        %778 = vmatprep.subr.bf16.mxu0 0
        %779 = vmatpush1.bf16.msra.mxu0 0
        %780 = vmatprep.subr.bf16.mxu0 0
        %781 = vmatpush1.bf16.msra.mxu0 0
        %782 = vmatprep.subr.bf16.mxu0 0
        %783 = vmatpush1.bf16.msra.mxu0 %v705
        %784 = vmatprep.subr.bf16.mxu0 0
        %785 = vmatpush2.bf16.msra.mxu0 0
        %786 = vmatprep.subr.bf16.mxu0 0
        %787 = vmatpush2.bf16.msra.mxu0 0
        %788 = vmatprep.subr.bf16.mxu0 0
        %789 = vmatpush2.bf16.msra.mxu0 0
        %790 = vmatprep.subr.bf16.mxu0 0
        %791 = vmatpush2.bf16.msra.mxu0 0
        %792 = vmatprep.subr.bf16.mxu0 0
        %793 = vmatpush2.bf16.msra.mxu0 0
        %794 = vmatprep.subr.bf16.mxu0 0
        %795 = vmatpush2.bf16.msra.mxu0 0
        %796 = vmatprep.subr.bf16.mxu0 0
        %797 = vmatpush2.bf16.msra.mxu0 0
        %798 = vmatprep.subr.bf16.mxu0 0
        %799 = vmatpush2.bf16.msra.mxu0 0
        %800 = vmatprep.mubr.bf16.mxu0 0
        %801 = vmatmul.mubr.bf16.gmra.mxu0 %v709
        %v802 = vpop.f32.mrf.mxu0
        %v803 = vadd.f32 0.0, %v802
        %v804 = vpop.f32.mrf.mxu0
        %v805 = vpop.f32.mrf.mxu0
        %v806 = vadd.f32 0.0, %v805
        %v807 = vpop.f32.mrf.mxu0
        %808 = vmatprep.mubr.bf16.mxu0 0
        %809 = vmatmul.mubr.bf16.gmra.mxu0 %v712
        %v810 = vpop.f32.mrf.mxu0
        %v811 = vadd.f32 0.0, %v810
        %v812 = vpop.f32.mrf.mxu0
        %v813 = vpop.f32.mrf.mxu0
        %v814 = vadd.f32 0.0, %v813
        %v815 = vpop.f32.mrf.mxu0
        %816 = vmatprep.mubr.bf16.mxu0 0
        %817 = vmatmul.mubr.bf16.gmra.mxu0 %v715
        %v818 = vpop.f32.mrf.mxu0
        %v819 = vadd.f32 0.0, %v818
        %v820 = vpop.f32.mrf.mxu0
        %v821 = vpop.f32.mrf.mxu0
        %v822 = vadd.f32 0.0, %v821
        %v823 = vpop.f32.mrf.mxu0
        %824 = vmatprep.mubr.bf16.mxu0 0
        %825 = vmatmul.mubr.bf16.gmra.mxu0 %v718
        %v826 = vpop.f32.mrf.mxu0
        %v827 = vadd.f32 0.0, %v826
        %v828 = vpop.f32.mrf.mxu0
        %v829 = vpop.f32.mrf.mxu0
        %v830 = vadd.f32 0.0, %v829
        %v831 = vpop.f32.mrf.mxu0
        %832 = vmatprep.mubr.bf16.mxu0 0
        %833 = vmatmul.mubr.bf16.gmra.mxu0 %v721
        %v834 = vpop.f32.mrf.mxu0
        %v835 = vadd.f32 0.0, %v834
        %v836 = vpop.f32.mrf.mxu0
        %v837 = vpop.f32.mrf.mxu0
        %v838 = vadd.f32 0.0, %v837
        %v839 = vpop.f32.mrf.mxu0
        %840 = vmatprep.mubr.bf16.mxu0 0
        %841 = vmatmul.mubr.bf16.gmra.mxu0 %v724
        %v842 = vpop.f32.mrf.mxu0
        %v843 = vadd.f32 0.0, %v842
        %v844 = vpop.f32.mrf.mxu0
        %v845 = vpop.f32.mrf.mxu0
        %v846 = vadd.f32 0.0, %v845
        %v847 = vpop.f32.mrf.mxu0
        %848 = vmatprep.mubr.bf16.mxu0 0
        %849 = vmatmul.mubr.bf16.gmra.mxu0 %v727
        %v850 = vpop.f32.mrf.mxu0
        %v851 = vadd.f32 0.0, %v850
        %v852 = vpop.f32.mrf.mxu0
        %v853 = vpop.f32.mrf.mxu0
        %v854 = vadd.f32 0.0, %v853
        %v855 = vpop.f32.mrf.mxu0
        %856 = vmatprep.mubr.bf16.mxu0 0
        %857 = vmatmul.mubr.bf16.gmra.mxu0 %v730
        %v858 = vpop.f32.mrf.mxu0
        %v859 = vadd.f32 0.0, %v858
        %v860 = vpop.f32.mrf.mxu0
        %v861 = vpop.f32.mrf.mxu0
        %v862 = vadd.f32 0.0, %v861
        %v863 = vpop.f32.mrf.mxu0
        %864 = vmatprep.mubr.bf16.mxu0 0
        %865 = vmatmul.mubr.bf16.gmra.mxu0 %v733
        %v866 = vpop.f32.mrf.mxu0
        %v867 = vadd.f32 0.0, %v866
        %v868 = vpop.f32.mrf.mxu0
        %v869 = vpop.f32.mrf.mxu0
        %v870 = vadd.f32 0.0, %v869
        %v871 = vpop.f32.mrf.mxu0
        %872 = vmatprep.mubr.bf16.mxu0 0
        %873 = vmatmul.mubr.bf16.gmra.mxu0 %v736
        %v874 = vpop.f32.mrf.mxu0
        %v875 = vadd.f32 0.0, %v874
        %v876 = vpop.f32.mrf.mxu0
        %v877 = vpop.f32.mrf.mxu0
        %v878 = vadd.f32 0.0, %v877
        %v879 = vpop.f32.mrf.mxu0
        %880 = vmatprep.mubr.bf16.mxu0 0
        %881 = vmatmul.mubr.bf16.gmra.mxu0 %v739
        %v882 = vpop.f32.mrf.mxu0
        %v883 = vadd.f32 0.0, %v882
        %v884 = vpop.f32.mrf.mxu0
        %v885 = vpop.f32.mrf.mxu0
        %v886 = vadd.f32 0.0, %v885
        %v887 = vpop.f32.mrf.mxu0
        %888 = vmatprep.mubr.bf16.mxu0 0
        %889 = vmatmul.mubr.bf16.gmra.mxu0 %v742
        %v890 = vpop.f32.mrf.mxu0
        %v891 = vadd.f32 0.0, %v890
        %v892 = vpop.f32.mrf.mxu0
        %v893 = vpop.f32.mrf.mxu0
        %v894 = vadd.f32 0.0, %v893
        %v895 = vpop.f32.mrf.mxu0
        %896 = vmatprep.mubr.bf16.mxu0 0
        %897 = vmatmul.mubr.bf16.gmra.mxu0 %v745
        %v898 = vpop.f32.mrf.mxu0
        %v899 = vadd.f32 0.0, %v898
        %v900 = vpop.f32.mrf.mxu0
        %v901 = vpop.f32.mrf.mxu0
        %v902 = vadd.f32 0.0, %v901
        %v903 = vpop.f32.mrf.mxu0
        %904 = vmatprep.mubr.bf16.mxu0 0
        %905 = vmatmul.mubr.bf16.gmra.mxu0 %v748
        %v906 = vpop.f32.mrf.mxu0
        %v907 = vadd.f32 0.0, %v906
        %v908 = vpop.f32.mrf.mxu0
        %v909 = vpop.f32.mrf.mxu0
        %v910 = vadd.f32 0.0, %v909
        %v911 = vpop.f32.mrf.mxu0
        %912 = vmatprep.mubr.bf16.mxu0 0
        %913 = vmatmul.mubr.bf16.gmra.mxu0 %v751
        %v914 = vpop.f32.mrf.mxu0
        %v915 = vadd.f32 0.0, %v914
        %v916 = vpop.f32.mrf.mxu0
        %v917 = vpop.f32.mrf.mxu0
        %v918 = vadd.f32 0.0, %v917
        %v919 = vpop.f32.mrf.mxu0
        %920 = vmatprep.mubr.bf16.mxu0 0
        %921 = vmatmul.mubr.bf16.gmra.mxu0 %v754
        %v922 = vpop.f32.mrf.mxu0
        %v923 = vadd.f32 0.0, %v922
        %v924 = vpop.f32.mrf.mxu0
        %v925 = vpop.f32.mrf.mxu0
        %v926 = vadd.f32 0.0, %v925
        %v927 = vpop.f32.mrf.mxu0
        %928 = vmatprep.mubr.bf16.mxu0 0
        %929 = vmatmul.mubr.bf16.gmra.mxu0 %v757
        %v930 = vpop.f32.mrf.mxu0
        %v931 = vadd.f32 0.0, %v930
        %v932 = vpop.f32.mrf.mxu0
        %v933 = vpop.f32.mrf.mxu0
        %v934 = vadd.f32 0.0, %v933
        %v935 = vpop.f32.mrf.mxu0
        %936 = vmatprep.mubr.bf16.mxu0 0
        %937 = vmatmul.mubr.bf16.gmra.mxu0 %v760
        %v938 = vpop.f32.mrf.mxu0
        %v939 = vadd.f32 0.0, %v938
        %v940 = vpop.f32.mrf.mxu0
        %v941 = vpop.f32.mrf.mxu0
        %v942 = vadd.f32 0.0, %v941
        %v943 = vpop.f32.mrf.mxu0
        %944 = vmatprep.mubr.bf16.mxu0 0
        %945 = vmatmul.mubr.bf16.gmra.mxu0 %v763
        %v946 = vpop.f32.mrf.mxu0
        %v947 = vadd.f32 0.0, %v946
        %v948 = vpop.f32.mrf.mxu0
        %v949 = vpop.f32.mrf.mxu0
        %v950 = vadd.f32 0.0, %v949
        %v951 = vpop.f32.mrf.mxu0
        %952 = vmatprep.mubr.bf16.mxu0 0
        %953 = vmatmul.mubr.bf16.gmra.mxu0 %v766
        %v954 = vpop.f32.mrf.mxu0
        %v955 = vadd.f32 0.0, %v954
        %v956 = vpop.f32.mrf.mxu0
        %v957 = vpop.f32.mrf.mxu0
        %v958 = vadd.f32 0.0, %v957
        %v959 = vpop.f32.mrf.mxu0
        %960 = vdwg.mxu0
        %v961 = vpack.c.bf16 %v806, %v803
        %v962 = vpack.c.bf16 %v814, %v811
        %v963 = vpack.c.bf16 %v822, %v819
        %v964 = vpack.c.bf16 %v830, %v827
        %v965 = vpack.c.bf16 %v838, %v835
        %v966 = vpack.c.bf16 %v846, %v843
        %v967 = vpack.c.bf16 %v854, %v851
        %v968 = vpack.c.bf16 %v862, %v859
        %v969 = vpack.c.bf16 %v870, %v867
        %v970 = vpack.c.bf16 %v878, %v875
        %v971 = vpack.c.bf16 %v886, %v883
        %v972 = vpack.c.bf16 %v894, %v891
        %v973 = vpack.c.bf16 %v902, %v899
        %v974 = vpack.c.bf16 %v910, %v907
        %v975 = vpack.c.bf16 %v918, %v915
        %v976 = vpack.c.bf16 %v926, %v923
        %v977 = vpack.c.bf16 %v934, %v931
        %v978 = vpack.c.bf16 %v942, %v939
        %v979 = vpack.c.bf16 %v950, %v947
        %v980 = vpack.c.bf16 %v958, %v955
        %v983 = vunpack.c.l.b16 %v559
        %v984 = vunpack.c.l.b16 %v560
        %v985 = vpack.c.b16 %v984, %v983
        %v987 = vsel %vm707, %v985, 0
        %989 = vmatprep.subr.bf16.mxu0 0
        %990 = vmatpush1.bf16.msra.mxu0 0
        %991 = vmatprep.subr.bf16.mxu0 0
        %992 = vmatpush1.bf16.msra.mxu0 0
        %993 = vmatprep.subr.bf16.mxu0 0
        %994 = vmatpush1.bf16.msra.mxu0 0
        %995 = vmatprep.subr.bf16.mxu0 0
        %996 = vmatpush1.bf16.msra.mxu0 0
        %997 = vmatprep.subr.bf16.mxu0 0
        %998 = vmatpush1.bf16.msra.mxu0 0
        %999 = vmatprep.subr.bf16.mxu0 0
        %1000 = vmatpush1.bf16.msra.mxu0 0
        %1001 = vmatprep.subr.bf16.mxu0 0
        %1002 = vmatpush1.bf16.msra.mxu0 0
        %1003 = vmatprep.subr.bf16.mxu0 0
        %1004 = vmatpush1.bf16.msra.mxu0 %v961
        %1005 = vmatprep.subr.bf16.mxu0 0
        %1006 = vmatpush2.bf16.msra.mxu0 0
        %1007 = vmatprep.subr.bf16.mxu0 0
        %1008 = vmatpush2.bf16.msra.mxu0 0
        %1009 = vmatprep.subr.bf16.mxu0 0
        %1010 = vmatpush2.bf16.msra.mxu0 0
        %1011 = vmatprep.subr.bf16.mxu0 0
        %1012 = vmatpush2.bf16.msra.mxu0 0
        %1013 = vmatprep.subr.bf16.mxu0 0
        %1014 = vmatpush2.bf16.msra.mxu0 0
        %1015 = vmatprep.subr.bf16.mxu0 0
        %1016 = vmatpush2.bf16.msra.mxu0 0
        %1017 = vmatprep.subr.bf16.mxu0 0
        %1018 = vmatpush2.bf16.msra.mxu0 0
        %1019 = vmatprep.subr.bf16.mxu0 0
        %1020 = vmatpush2.bf16.msra.mxu0 0
        %1021 = vmatprep.mubr.bf16.mxu0 0
        %1022 = vmatmul.mubr.bf16.gmra.mxu0 %v987
        %v1023 = vpop.f32.mrf.mxu0
        %v1024 = vadd.f32 0.0, %v1023
        %v1025 = vpop.f32.mrf.mxu0
        %v1026 = vpop.f32.mrf.mxu0
        %v1027 = vadd.f32 0.0, %v1026
        %v1028 = vpop.f32.mrf.mxu0
        %1029 = vdwg.mxu0
        %1030 = vmatprep.subr.bf16.mxu0 0
        %1031 = vmatpush1.bf16.msra.mxu0 0
        %1032 = vmatprep.subr.bf16.mxu0 0
        %1033 = vmatpush1.bf16.msra.mxu0 0
        %1034 = vmatprep.subr.bf16.mxu0 0
        %1035 = vmatpush1.bf16.msra.mxu0 0
        %1036 = vmatprep.subr.bf16.mxu0 0
        %1037 = vmatpush1.bf16.msra.mxu0 0
        %1038 = vmatprep.subr.bf16.mxu0 0
        %1039 = vmatpush1.bf16.msra.mxu0 0
        %1040 = vmatprep.subr.bf16.mxu0 0
        %1041 = vmatpush1.bf16.msra.mxu0 0
        %1042 = vmatprep.subr.bf16.mxu0 0
        %1043 = vmatpush1.bf16.msra.mxu0 0
        %1044 = vmatprep.subr.bf16.mxu0 0
        %1045 = vmatpush1.bf16.msra.mxu0 %v962
        %1046 = vmatprep.subr.bf16.mxu0 0
        %1047 = vmatpush2.bf16.msra.mxu0 0
        %1048 = vmatprep.subr.bf16.mxu0 0
        %1049 = vmatpush2.bf16.msra.mxu0 0
        %1050 = vmatprep.subr.bf16.mxu0 0
        %1051 = vmatpush2.bf16.msra.mxu0 0
        %1052 = vmatprep.subr.bf16.mxu0 0
        %1053 = vmatpush2.bf16.msra.mxu0 0
        %1054 = vmatprep.subr.bf16.mxu0 0
        %1055 = vmatpush2.bf16.msra.mxu0 0
        %1056 = vmatprep.subr.bf16.mxu0 0
        %1057 = vmatpush2.bf16.msra.mxu0 0
        %1058 = vmatprep.subr.bf16.mxu0 0
        %1059 = vmatpush2.bf16.msra.mxu0 0
        %1060 = vmatprep.subr.bf16.mxu0 0
        %1061 = vmatpush2.bf16.msra.mxu0 0
        %1062 = vmatprep.mubr.bf16.mxu0 0
        %1063 = vmatmul.mubr.bf16.gmra.mxu0 %v987
        %v1064 = vpop.f32.mrf.mxu0
        %v1065 = vadd.f32 0.0, %v1064
        %v1066 = vpop.f32.mrf.mxu0
        %v1067 = vpop.f32.mrf.mxu0
        %v1068 = vadd.f32 0.0, %v1067
        %v1069 = vpop.f32.mrf.mxu0
        %1070 = vdwg.mxu0
        %1071 = vmatprep.subr.bf16.mxu0 0
        %1072 = vmatpush1.bf16.msra.mxu0 0
        %1073 = vmatprep.subr.bf16.mxu0 0
        %1074 = vmatpush1.bf16.msra.mxu0 0
        %1075 = vmatprep.subr.bf16.mxu0 0
        %1076 = vmatpush1.bf16.msra.mxu0 0
        %1077 = vmatprep.subr.bf16.mxu0 0
        %1078 = vmatpush1.bf16.msra.mxu0 0
        %1079 = vmatprep.subr.bf16.mxu0 0
        %1080 = vmatpush1.bf16.msra.mxu0 0
        %1081 = vmatprep.subr.bf16.mxu0 0
        %1082 = vmatpush1.bf16.msra.mxu0 0
        %1083 = vmatprep.subr.bf16.mxu0 0
        %1084 = vmatpush1.bf16.msra.mxu0 0
        %1085 = vmatprep.subr.bf16.mxu0 0
        %1086 = vmatpush1.bf16.msra.mxu0 %v963
        %1087 = vmatprep.subr.bf16.mxu0 0
        %1088 = vmatpush2.bf16.msra.mxu0 0
        %1089 = vmatprep.subr.bf16.mxu0 0
        %1090 = vmatpush2.bf16.msra.mxu0 0
        %1091 = vmatprep.subr.bf16.mxu0 0
        %1092 = vmatpush2.bf16.msra.mxu0 0
        %1093 = vmatprep.subr.bf16.mxu0 0
        %1094 = vmatpush2.bf16.msra.mxu0 0
        %1095 = vmatprep.subr.bf16.mxu0 0
        %1096 = vmatpush2.bf16.msra.mxu0 0
        %1097 = vmatprep.subr.bf16.mxu0 0
        %1098 = vmatpush2.bf16.msra.mxu0 0
        %1099 = vmatprep.subr.bf16.mxu0 0
        %1100 = vmatpush2.bf16.msra.mxu0 0
        %1101 = vmatprep.subr.bf16.mxu0 0
        %1102 = vmatpush2.bf16.msra.mxu0 0
        %1103 = vmatprep.mubr.bf16.mxu0 0
        %1104 = vmatmul.mubr.bf16.gmra.mxu0 %v987
        %v1105 = vpop.f32.mrf.mxu0
        %v1106 = vadd.f32 0.0, %v1105
        %v1107 = vpop.f32.mrf.mxu0
        %v1108 = vpop.f32.mrf.mxu0
        %v1109 = vadd.f32 0.0, %v1108
        %v1110 = vpop.f32.mrf.mxu0
        %1111 = vdwg.mxu0
        %1112 = vmatprep.subr.bf16.mxu0 0
        %1113 = vmatpush1.bf16.msra.mxu0 0
        %1114 = vmatprep.subr.bf16.mxu0 0
        %1115 = vmatpush1.bf16.msra.mxu0 0
        %1116 = vmatprep.subr.bf16.mxu0 0
        %1117 = vmatpush1.bf16.msra.mxu0 0
        %1118 = vmatprep.subr.bf16.mxu0 0
        %1119 = vmatpush1.bf16.msra.mxu0 0
        %1120 = vmatprep.subr.bf16.mxu0 0
        %1121 = vmatpush1.bf16.msra.mxu0 0
        %1122 = vmatprep.subr.bf16.mxu0 0
        %1123 = vmatpush1.bf16.msra.mxu0 0
        %1124 = vmatprep.subr.bf16.mxu0 0
        %1125 = vmatpush1.bf16.msra.mxu0 0
        %1126 = vmatprep.subr.bf16.mxu0 0
        %1127 = vmatpush1.bf16.msra.mxu0 %v964
        %1128 = vmatprep.subr.bf16.mxu0 0
        %1129 = vmatpush2.bf16.msra.mxu0 0
        %1130 = vmatprep.subr.bf16.mxu0 0
        %1131 = vmatpush2.bf16.msra.mxu0 0
        %1132 = vmatprep.subr.bf16.mxu0 0
        %1133 = vmatpush2.bf16.msra.mxu0 0
        %1134 = vmatprep.subr.bf16.mxu0 0
        %1135 = vmatpush2.bf16.msra.mxu0 0
        %1136 = vmatprep.subr.bf16.mxu0 0
        %1137 = vmatpush2.bf16.msra.mxu0 0
        %1138 = vmatprep.subr.bf16.mxu0 0
        %1139 = vmatpush2.bf16.msra.mxu0 0
        %1140 = vmatprep.subr.bf16.mxu0 0
        %1141 = vmatpush2.bf16.msra.mxu0 0
        %1142 = vmatprep.subr.bf16.mxu0 0
        %1143 = vmatpush2.bf16.msra.mxu0 0
        %1144 = vmatprep.mubr.bf16.mxu0 0
        %1145 = vmatmul.mubr.bf16.gmra.mxu0 %v987
        %v1146 = vpop.f32.mrf.mxu0
        %v1147 = vadd.f32 0.0, %v1146
        %v1148 = vpop.f32.mrf.mxu0
        %v1149 = vpop.f32.mrf.mxu0
        %v1150 = vadd.f32 0.0, %v1149
        %v1151 = vpop.f32.mrf.mxu0
        %1152 = vdwg.mxu0
        %1153 = vmatprep.subr.bf16.mxu0 0
        %1154 = vmatpush1.bf16.msra.mxu0 0
        %1155 = vmatprep.subr.bf16.mxu0 0
        %1156 = vmatpush1.bf16.msra.mxu0 0
        %1157 = vmatprep.subr.bf16.mxu0 0
        %1158 = vmatpush1.bf16.msra.mxu0 0
        %1159 = vmatprep.subr.bf16.mxu0 0
        %1160 = vmatpush1.bf16.msra.mxu0 0
        %1161 = vmatprep.subr.bf16.mxu0 0
        %1162 = vmatpush1.bf16.msra.mxu0 0
        %1163 = vmatprep.subr.bf16.mxu0 0
        %1164 = vmatpush1.bf16.msra.mxu0 0
        %1165 = vmatprep.subr.bf16.mxu0 0
        %1166 = vmatpush1.bf16.msra.mxu0 0
        %1167 = vmatprep.subr.bf16.mxu0 0
        %1168 = vmatpush1.bf16.msra.mxu0 %v965
        %1169 = vmatprep.subr.bf16.mxu0 0
        %1170 = vmatpush2.bf16.msra.mxu0 0
        %1171 = vmatprep.subr.bf16.mxu0 0
        %1172 = vmatpush2.bf16.msra.mxu0 0
        %1173 = vmatprep.subr.bf16.mxu0 0
        %1174 = vmatpush2.bf16.msra.mxu0 0
        %1175 = vmatprep.subr.bf16.mxu0 0
        %1176 = vmatpush2.bf16.msra.mxu0 0
        %1177 = vmatprep.subr.bf16.mxu0 0
        %1178 = vmatpush2.bf16.msra.mxu0 0
        %1179 = vmatprep.subr.bf16.mxu0 0
        %1180 = vmatpush2.bf16.msra.mxu0 0
        %1181 = vmatprep.subr.bf16.mxu0 0
        %1182 = vmatpush2.bf16.msra.mxu0 0
        %1183 = vmatprep.subr.bf16.mxu0 0
        %1184 = vmatpush2.bf16.msra.mxu0 0
        %1185 = vmatprep.mubr.bf16.mxu0 0
        %1186 = vmatmul.mubr.bf16.gmra.mxu0 %v987
        %v1187 = vpop.f32.mrf.mxu0
        %v1188 = vadd.f32 0.0, %v1187
        %v1189 = vpop.f32.mrf.mxu0
        %v1190 = vpop.f32.mrf.mxu0
        %v1191 = vadd.f32 0.0, %v1190
        %v1192 = vpop.f32.mrf.mxu0
        %1193 = vdwg.mxu0
        %1194 = vmatprep.subr.bf16.mxu0 0
        %1195 = vmatpush1.bf16.msra.mxu0 0
        %1196 = vmatprep.subr.bf16.mxu0 0
        %1197 = vmatpush1.bf16.msra.mxu0 0
        %1198 = vmatprep.subr.bf16.mxu0 0
        %1199 = vmatpush1.bf16.msra.mxu0 0
        %1200 = vmatprep.subr.bf16.mxu0 0
        %1201 = vmatpush1.bf16.msra.mxu0 0
        %1202 = vmatprep.subr.bf16.mxu0 0
        %1203 = vmatpush1.bf16.msra.mxu0 0
        %1204 = vmatprep.subr.bf16.mxu0 0
        %1205 = vmatpush1.bf16.msra.mxu0 0
        %1206 = vmatprep.subr.bf16.mxu0 0
        %1207 = vmatpush1.bf16.msra.mxu0 0
        %1208 = vmatprep.subr.bf16.mxu0 0
        %1209 = vmatpush1.bf16.msra.mxu0 %v966
        %1210 = vmatprep.subr.bf16.mxu0 0
        %1211 = vmatpush2.bf16.msra.mxu0 0
        %1212 = vmatprep.subr.bf16.mxu0 0
        %1213 = vmatpush2.bf16.msra.mxu0 0
        %1214 = vmatprep.subr.bf16.mxu0 0
        %1215 = vmatpush2.bf16.msra.mxu0 0
        %1216 = vmatprep.subr.bf16.mxu0 0
        %1217 = vmatpush2.bf16.msra.mxu0 0
        %1218 = vmatprep.subr.bf16.mxu0 0
        %1219 = vmatpush2.bf16.msra.mxu0 0
        %1220 = vmatprep.subr.bf16.mxu0 0
        %1221 = vmatpush2.bf16.msra.mxu0 0
        %1222 = vmatprep.subr.bf16.mxu0 0
        %1223 = vmatpush2.bf16.msra.mxu0 0
        %1224 = vmatprep.subr.bf16.mxu0 0
        %1225 = vmatpush2.bf16.msra.mxu0 0
        %1226 = vmatprep.mubr.bf16.mxu0 0
        %1227 = vmatmul.mubr.bf16.gmra.mxu0 %v987
        %v1228 = vpop.f32.mrf.mxu0
        %v1229 = vadd.f32 0.0, %v1228
        %v1230 = vpop.f32.mrf.mxu0
        %v1231 = vpop.f32.mrf.mxu0
        %v1232 = vadd.f32 0.0, %v1231
        %v1233 = vpop.f32.mrf.mxu0
        %1234 = vdwg.mxu0
        %1235 = vmatprep.subr.bf16.mxu0 0
        %1236 = vmatpush1.bf16.msra.mxu0 0
        %1237 = vmatprep.subr.bf16.mxu0 0
        %1238 = vmatpush1.bf16.msra.mxu0 0
        %1239 = vmatprep.subr.bf16.mxu0 0
        %1240 = vmatpush1.bf16.msra.mxu0 0
        %1241 = vmatprep.subr.bf16.mxu0 0
        %1242 = vmatpush1.bf16.msra.mxu0 0
        %1243 = vmatprep.subr.bf16.mxu0 0
        %1244 = vmatpush1.bf16.msra.mxu0 0
        %1245 = vmatprep.subr.bf16.mxu0 0
        %1246 = vmatpush1.bf16.msra.mxu0 0
        %1247 = vmatprep.subr.bf16.mxu0 0
        %1248 = vmatpush1.bf16.msra.mxu0 0
        %1249 = vmatprep.subr.bf16.mxu0 0
        %1250 = vmatpush1.bf16.msra.mxu0 %v967
        %1251 = vmatprep.subr.bf16.mxu0 0
        %1252 = vmatpush2.bf16.msra.mxu0 0
        %1253 = vmatprep.subr.bf16.mxu0 0
        %1254 = vmatpush2.bf16.msra.mxu0 0
        %1255 = vmatprep.subr.bf16.mxu0 0
        %1256 = vmatpush2.bf16.msra.mxu0 0
        %1257 = vmatprep.subr.bf16.mxu0 0
        %1258 = vmatpush2.bf16.msra.mxu0 0
        %1259 = vmatprep.subr.bf16.mxu0 0
        %1260 = vmatpush2.bf16.msra.mxu0 0
        %1261 = vmatprep.subr.bf16.mxu0 0
        %1262 = vmatpush2.bf16.msra.mxu0 0
        %1263 = vmatprep.subr.bf16.mxu0 0
        %1264 = vmatpush2.bf16.msra.mxu0 0
        %1265 = vmatprep.subr.bf16.mxu0 0
        %1266 = vmatpush2.bf16.msra.mxu0 0
        %1267 = vmatprep.mubr.bf16.mxu0 0
        %1268 = vmatmul.mubr.bf16.gmra.mxu0 %v987
        %v1269 = vpop.f32.mrf.mxu0
        %v1270 = vadd.f32 0.0, %v1269
        %v1271 = vpop.f32.mrf.mxu0
        %v1272 = vpop.f32.mrf.mxu0
        %v1273 = vadd.f32 0.0, %v1272
        %v1274 = vpop.f32.mrf.mxu0
        %1275 = vdwg.mxu0
        %1276 = vmatprep.subr.bf16.mxu0 0
        %1277 = vmatpush1.bf16.msra.mxu0 0
        %1278 = vmatprep.subr.bf16.mxu0 0
        %1279 = vmatpush1.bf16.msra.mxu0 0
        %1280 = vmatprep.subr.bf16.mxu0 0
        %1281 = vmatpush1.bf16.msra.mxu0 0
        %1282 = vmatprep.subr.bf16.mxu0 0
        %1283 = vmatpush1.bf16.msra.mxu0 0
        %1284 = vmatprep.subr.bf16.mxu0 0
        %1285 = vmatpush1.bf16.msra.mxu0 0
        %1286 = vmatprep.subr.bf16.mxu0 0
        %1287 = vmatpush1.bf16.msra.mxu0 0
        %1288 = vmatprep.subr.bf16.mxu0 0
        %1289 = vmatpush1.bf16.msra.mxu0 0
        %1290 = vmatprep.subr.bf16.mxu0 0
        %1291 = vmatpush1.bf16.msra.mxu0 %v968
        %1292 = vmatprep.subr.bf16.mxu0 0
        %1293 = vmatpush2.bf16.msra.mxu0 0
        %1294 = vmatprep.subr.bf16.mxu0 0
        %1295 = vmatpush2.bf16.msra.mxu0 0
        %1296 = vmatprep.subr.bf16.mxu0 0
        %1297 = vmatpush2.bf16.msra.mxu0 0
        %1298 = vmatprep.subr.bf16.mxu0 0
        %1299 = vmatpush2.bf16.msra.mxu0 0
        %1300 = vmatprep.subr.bf16.mxu0 0
        %1301 = vmatpush2.bf16.msra.mxu0 0
        %1302 = vmatprep.subr.bf16.mxu0 0
        %1303 = vmatpush2.bf16.msra.mxu0 0
        %1304 = vmatprep.subr.bf16.mxu0 0
        %1305 = vmatpush2.bf16.msra.mxu0 0
        %1306 = vmatprep.subr.bf16.mxu0 0
        %1307 = vmatpush2.bf16.msra.mxu0 0
        %1308 = vmatprep.mubr.bf16.mxu0 0
        %1309 = vmatmul.mubr.bf16.gmra.mxu0 %v987
        %v1310 = vpop.f32.mrf.mxu0
        %v1311 = vadd.f32 0.0, %v1310
        %v1312 = vpop.f32.mrf.mxu0
        %v1313 = vpop.f32.mrf.mxu0
        %v1314 = vadd.f32 0.0, %v1313
        %v1315 = vpop.f32.mrf.mxu0
        %1316 = vdwg.mxu0
        %1317 = vmatprep.subr.bf16.mxu0 0
        %1318 = vmatpush1.bf16.msra.mxu0 0
        %1319 = vmatprep.subr.bf16.mxu0 0
        %1320 = vmatpush1.bf16.msra.mxu0 0
        %1321 = vmatprep.subr.bf16.mxu0 0
        %1322 = vmatpush1.bf16.msra.mxu0 0
        %1323 = vmatprep.subr.bf16.mxu0 0
        %1324 = vmatpush1.bf16.msra.mxu0 0
        %1325 = vmatprep.subr.bf16.mxu0 0
        %1326 = vmatpush1.bf16.msra.mxu0 0
        %1327 = vmatprep.subr.bf16.mxu0 0
        %1328 = vmatpush1.bf16.msra.mxu0 0
        %1329 = vmatprep.subr.bf16.mxu0 0
        %1330 = vmatpush1.bf16.msra.mxu0 0
        %1331 = vmatprep.subr.bf16.mxu0 0
        %1332 = vmatpush1.bf16.msra.mxu0 %v969
        %1333 = vmatprep.subr.bf16.mxu0 0
        %1334 = vmatpush2.bf16.msra.mxu0 0
        %1335 = vmatprep.subr.bf16.mxu0 0
        %1336 = vmatpush2.bf16.msra.mxu0 0
        %1337 = vmatprep.subr.bf16.mxu0 0
        %1338 = vmatpush2.bf16.msra.mxu0 0
        %1339 = vmatprep.subr.bf16.mxu0 0
        %1340 = vmatpush2.bf16.msra.mxu0 0
        %1341 = vmatprep.subr.bf16.mxu0 0
        %1342 = vmatpush2.bf16.msra.mxu0 0
        %1343 = vmatprep.subr.bf16.mxu0 0
        %1344 = vmatpush2.bf16.msra.mxu0 0
        %1345 = vmatprep.subr.bf16.mxu0 0
        %1346 = vmatpush2.bf16.msra.mxu0 0
        %1347 = vmatprep.subr.bf16.mxu0 0
        %1348 = vmatpush2.bf16.msra.mxu0 0
        %1349 = vmatprep.mubr.bf16.mxu0 0
        %1350 = vmatmul.mubr.bf16.gmra.mxu0 %v987
        %v1351 = vpop.f32.mrf.mxu0
        %v1352 = vadd.f32 0.0, %v1351
        %v1353 = vpop.f32.mrf.mxu0
        %v1354 = vpop.f32.mrf.mxu0
        %v1355 = vadd.f32 0.0, %v1354
        %v1356 = vpop.f32.mrf.mxu0
        %1357 = vdwg.mxu0
        %1358 = vmatprep.subr.bf16.mxu0 0
        %1359 = vmatpush1.bf16.msra.mxu0 0
        %1360 = vmatprep.subr.bf16.mxu0 0
        %1361 = vmatpush1.bf16.msra.mxu0 0
        %1362 = vmatprep.subr.bf16.mxu0 0
        %1363 = vmatpush1.bf16.msra.mxu0 0
        %1364 = vmatprep.subr.bf16.mxu0 0
        %1365 = vmatpush1.bf16.msra.mxu0 0
        %1366 = vmatprep.subr.bf16.mxu0 0
        %1367 = vmatpush1.bf16.msra.mxu0 0
        %1368 = vmatprep.subr.bf16.mxu0 0
        %1369 = vmatpush1.bf16.msra.mxu0 0
        %1370 = vmatprep.subr.bf16.mxu0 0
        %1371 = vmatpush1.bf16.msra.mxu0 0
        %1372 = vmatprep.subr.bf16.mxu0 0
        %1373 = vmatpush1.bf16.msra.mxu0 %v970
        %1374 = vmatprep.subr.bf16.mxu0 0
        %1375 = vmatpush2.bf16.msra.mxu0 0
        %1376 = vmatprep.subr.bf16.mxu0 0
        %1377 = vmatpush2.bf16.msra.mxu0 0
        %1378 = vmatprep.subr.bf16.mxu0 0
        %1379 = vmatpush2.bf16.msra.mxu0 0
        %1380 = vmatprep.subr.bf16.mxu0 0
        %1381 = vmatpush2.bf16.msra.mxu0 0
        %1382 = vmatprep.subr.bf16.mxu0 0
        %1383 = vmatpush2.bf16.msra.mxu0 0
        %1384 = vmatprep.subr.bf16.mxu0 0
        %1385 = vmatpush2.bf16.msra.mxu0 0
        %1386 = vmatprep.subr.bf16.mxu0 0
        %1387 = vmatpush2.bf16.msra.mxu0 0
        %1388 = vmatprep.subr.bf16.mxu0 0
        %1389 = vmatpush2.bf16.msra.mxu0 0
        %1390 = vmatprep.mubr.bf16.mxu0 0
        %1391 = vmatmul.mubr.bf16.gmra.mxu0 %v987
        %v1392 = vpop.f32.mrf.mxu0
        %v1393 = vadd.f32 0.0, %v1392
        %v1394 = vpop.f32.mrf.mxu0
        %v1395 = vpop.f32.mrf.mxu0
        %v1396 = vadd.f32 0.0, %v1395
        %v1397 = vpop.f32.mrf.mxu0
        %1398 = vdwg.mxu0
        %1399 = vmatprep.subr.bf16.mxu0 0
        %1400 = vmatpush1.bf16.msra.mxu0 0
        %1401 = vmatprep.subr.bf16.mxu0 0
        %1402 = vmatpush1.bf16.msra.mxu0 0
        %1403 = vmatprep.subr.bf16.mxu0 0
        %1404 = vmatpush1.bf16.msra.mxu0 0
        %1405 = vmatprep.subr.bf16.mxu0 0
        %1406 = vmatpush1.bf16.msra.mxu0 0
        %1407 = vmatprep.subr.bf16.mxu0 0
        %1408 = vmatpush1.bf16.msra.mxu0 0
        %1409 = vmatprep.subr.bf16.mxu0 0
        %1410 = vmatpush1.bf16.msra.mxu0 0
        %1411 = vmatprep.subr.bf16.mxu0 0
        %1412 = vmatpush1.bf16.msra.mxu0 0
        %1413 = vmatprep.subr.bf16.mxu0 0
        %1414 = vmatpush1.bf16.msra.mxu0 %v971
        %1415 = vmatprep.subr.bf16.mxu0 0
        %1416 = vmatpush2.bf16.msra.mxu0 0
        %1417 = vmatprep.subr.bf16.mxu0 0
        %1418 = vmatpush2.bf16.msra.mxu0 0
        %1419 = vmatprep.subr.bf16.mxu0 0
        %1420 = vmatpush2.bf16.msra.mxu0 0
        %1421 = vmatprep.subr.bf16.mxu0 0
        %1422 = vmatpush2.bf16.msra.mxu0 0
        %1423 = vmatprep.subr.bf16.mxu0 0
        %1424 = vmatpush2.bf16.msra.mxu0 0
        %1425 = vmatprep.subr.bf16.mxu0 0
        %1426 = vmatpush2.bf16.msra.mxu0 0
        %1427 = vmatprep.subr.bf16.mxu0 0
        %1428 = vmatpush2.bf16.msra.mxu0 0
        %1429 = vmatprep.subr.bf16.mxu0 0
        %1430 = vmatpush2.bf16.msra.mxu0 0
        %1431 = vmatprep.mubr.bf16.mxu0 0
        %1432 = vmatmul.mubr.bf16.gmra.mxu0 %v987
        %v1433 = vpop.f32.mrf.mxu0
        %v1434 = vadd.f32 0.0, %v1433
        %v1435 = vpop.f32.mrf.mxu0
        %v1436 = vpop.f32.mrf.mxu0
        %v1437 = vadd.f32 0.0, %v1436
        %v1438 = vpop.f32.mrf.mxu0
        %1439 = vdwg.mxu0
        %1440 = vmatprep.subr.bf16.mxu0 0
        %1441 = vmatpush1.bf16.msra.mxu0 0
        %1442 = vmatprep.subr.bf16.mxu0 0
        %1443 = vmatpush1.bf16.msra.mxu0 0
        %1444 = vmatprep.subr.bf16.mxu0 0
        %1445 = vmatpush1.bf16.msra.mxu0 0
        %1446 = vmatprep.subr.bf16.mxu0 0
        %1447 = vmatpush1.bf16.msra.mxu0 0
        %1448 = vmatprep.subr.bf16.mxu0 0
        %1449 = vmatpush1.bf16.msra.mxu0 0
        %1450 = vmatprep.subr.bf16.mxu0 0
        %1451 = vmatpush1.bf16.msra.mxu0 0
        %1452 = vmatprep.subr.bf16.mxu0 0
        %1453 = vmatpush1.bf16.msra.mxu0 0
        %1454 = vmatprep.subr.bf16.mxu0 0
        %1455 = vmatpush1.bf16.msra.mxu0 %v972
        %1456 = vmatprep.subr.bf16.mxu0 0
        %1457 = vmatpush2.bf16.msra.mxu0 0
        %1458 = vmatprep.subr.bf16.mxu0 0
        %1459 = vmatpush2.bf16.msra.mxu0 0
        %1460 = vmatprep.subr.bf16.mxu0 0
        %1461 = vmatpush2.bf16.msra.mxu0 0
        %1462 = vmatprep.subr.bf16.mxu0 0
        %1463 = vmatpush2.bf16.msra.mxu0 0
        %1464 = vmatprep.subr.bf16.mxu0 0
        %1465 = vmatpush2.bf16.msra.mxu0 0
        %1466 = vmatprep.subr.bf16.mxu0 0
        %1467 = vmatpush2.bf16.msra.mxu0 0
        %1468 = vmatprep.subr.bf16.mxu0 0
        %1469 = vmatpush2.bf16.msra.mxu0 0
        %1470 = vmatprep.subr.bf16.mxu0 0
        %1471 = vmatpush2.bf16.msra.mxu0 0
        %1472 = vmatprep.mubr.bf16.mxu0 0
        %1473 = vmatmul.mubr.bf16.gmra.mxu0 %v987
        %v1474 = vpop.f32.mrf.mxu0
        %v1475 = vadd.f32 0.0, %v1474
        %v1476 = vpop.f32.mrf.mxu0
        %v1477 = vpop.f32.mrf.mxu0
        %v1478 = vadd.f32 0.0, %v1477
        %v1479 = vpop.f32.mrf.mxu0
        %1480 = vdwg.mxu0
        %1481 = vmatprep.subr.bf16.mxu0 0
        %1482 = vmatpush1.bf16.msra.mxu0 0
        %1483 = vmatprep.subr.bf16.mxu0 0
        %1484 = vmatpush1.bf16.msra.mxu0 0
        %1485 = vmatprep.subr.bf16.mxu0 0
        %1486 = vmatpush1.bf16.msra.mxu0 0
        %1487 = vmatprep.subr.bf16.mxu0 0
        %1488 = vmatpush1.bf16.msra.mxu0 0
        %1489 = vmatprep.subr.bf16.mxu0 0
        %1490 = vmatpush1.bf16.msra.mxu0 0
        %1491 = vmatprep.subr.bf16.mxu0 0
        %1492 = vmatpush1.bf16.msra.mxu0 0
        %1493 = vmatprep.subr.bf16.mxu0 0
        %1494 = vmatpush1.bf16.msra.mxu0 0
        %1495 = vmatprep.subr.bf16.mxu0 0
        %1496 = vmatpush1.bf16.msra.mxu0 %v973
        %1497 = vmatprep.subr.bf16.mxu0 0
        %1498 = vmatpush2.bf16.msra.mxu0 0
        %1499 = vmatprep.subr.bf16.mxu0 0
        %1500 = vmatpush2.bf16.msra.mxu0 0
        %1501 = vmatprep.subr.bf16.mxu0 0
        %1502 = vmatpush2.bf16.msra.mxu0 0
        %1503 = vmatprep.subr.bf16.mxu0 0
        %1504 = vmatpush2.bf16.msra.mxu0 0
        %1505 = vmatprep.subr.bf16.mxu0 0
        %1506 = vmatpush2.bf16.msra.mxu0 0
        %1507 = vmatprep.subr.bf16.mxu0 0
        %1508 = vmatpush2.bf16.msra.mxu0 0
        %1509 = vmatprep.subr.bf16.mxu0 0
        %1510 = vmatpush2.bf16.msra.mxu0 0
        %1511 = vmatprep.subr.bf16.mxu0 0
        %1512 = vmatpush2.bf16.msra.mxu0 0
        %1513 = vmatprep.mubr.bf16.mxu0 0
        %1514 = vmatmul.mubr.bf16.gmra.mxu0 %v987
        %v1515 = vpop.f32.mrf.mxu0
        %v1516 = vadd.f32 0.0, %v1515
        %v1517 = vpop.f32.mrf.mxu0
        %v1518 = vpop.f32.mrf.mxu0
        %v1519 = vadd.f32 0.0, %v1518
        %v1520 = vpop.f32.mrf.mxu0
        %1521 = vdwg.mxu0
        %1522 = vmatprep.subr.bf16.mxu0 0
        %1523 = vmatpush1.bf16.msra.mxu0 0
        %1524 = vmatprep.subr.bf16.mxu0 0
        %1525 = vmatpush1.bf16.msra.mxu0 0
        %1526 = vmatprep.subr.bf16.mxu0 0
        %1527 = vmatpush1.bf16.msra.mxu0 0
        %1528 = vmatprep.subr.bf16.mxu0 0
        %1529 = vmatpush1.bf16.msra.mxu0 0
        %1530 = vmatprep.subr.bf16.mxu0 0
        %1531 = vmatpush1.bf16.msra.mxu0 0
        %1532 = vmatprep.subr.bf16.mxu0 0
        %1533 = vmatpush1.bf16.msra.mxu0 0
        %1534 = vmatprep.subr.bf16.mxu0 0
        %1535 = vmatpush1.bf16.msra.mxu0 0
        %1536 = vmatprep.subr.bf16.mxu0 0
        %1537 = vmatpush1.bf16.msra.mxu0 %v974
        %1538 = vmatprep.subr.bf16.mxu0 0
        %1539 = vmatpush2.bf16.msra.mxu0 0
        %1540 = vmatprep.subr.bf16.mxu0 0
        %1541 = vmatpush2.bf16.msra.mxu0 0
        %1542 = vmatprep.subr.bf16.mxu0 0
        %1543 = vmatpush2.bf16.msra.mxu0 0
        %1544 = vmatprep.subr.bf16.mxu0 0
        %1545 = vmatpush2.bf16.msra.mxu0 0
        %1546 = vmatprep.subr.bf16.mxu0 0
        %1547 = vmatpush2.bf16.msra.mxu0 0
        %1548 = vmatprep.subr.bf16.mxu0 0
        %1549 = vmatpush2.bf16.msra.mxu0 0
        %1550 = vmatprep.subr.bf16.mxu0 0
        %1551 = vmatpush2.bf16.msra.mxu0 0
        %1552 = vmatprep.subr.bf16.mxu0 0
        %1553 = vmatpush2.bf16.msra.mxu0 0
        %1554 = vmatprep.mubr.bf16.mxu0 0
        %1555 = vmatmul.mubr.bf16.gmra.mxu0 %v987
        %v1556 = vpop.f32.mrf.mxu0
        %v1557 = vadd.f32 0.0, %v1556
        %v1558 = vpop.f32.mrf.mxu0
        %v1559 = vpop.f32.mrf.mxu0
        %v1560 = vadd.f32 0.0, %v1559
        %v1561 = vpop.f32.mrf.mxu0
        %1562 = vdwg.mxu0
        %1563 = vmatprep.subr.bf16.mxu0 0
        %1564 = vmatpush1.bf16.msra.mxu0 0
        %1565 = vmatprep.subr.bf16.mxu0 0
        %1566 = vmatpush1.bf16.msra.mxu0 0
        %1567 = vmatprep.subr.bf16.mxu0 0
        %1568 = vmatpush1.bf16.msra.mxu0 0
        %1569 = vmatprep.subr.bf16.mxu0 0
        %1570 = vmatpush1.bf16.msra.mxu0 0
        %1571 = vmatprep.subr.bf16.mxu0 0
        %1572 = vmatpush1.bf16.msra.mxu0 0
        %1573 = vmatprep.subr.bf16.mxu0 0
        %1574 = vmatpush1.bf16.msra.mxu0 0
        %1575 = vmatprep.subr.bf16.mxu0 0
        %1576 = vmatpush1.bf16.msra.mxu0 0
        %1577 = vmatprep.subr.bf16.mxu0 0
        %1578 = vmatpush1.bf16.msra.mxu0 %v975
        %1579 = vmatprep.subr.bf16.mxu0 0
        %1580 = vmatpush2.bf16.msra.mxu0 0
        %1581 = vmatprep.subr.bf16.mxu0 0
        %1582 = vmatpush2.bf16.msra.mxu0 0
        %1583 = vmatprep.subr.bf16.mxu0 0
        %1584 = vmatpush2.bf16.msra.mxu0 0
        %1585 = vmatprep.subr.bf16.mxu0 0
        %1586 = vmatpush2.bf16.msra.mxu0 0
        %1587 = vmatprep.subr.bf16.mxu0 0
        %1588 = vmatpush2.bf16.msra.mxu0 0
        %1589 = vmatprep.subr.bf16.mxu0 0
        %1590 = vmatpush2.bf16.msra.mxu0 0
        %1591 = vmatprep.subr.bf16.mxu0 0
        %1592 = vmatpush2.bf16.msra.mxu0 0
        %1593 = vmatprep.subr.bf16.mxu0 0
        %1594 = vmatpush2.bf16.msra.mxu0 0
        %1595 = vmatprep.mubr.bf16.mxu0 0
        %1596 = vmatmul.mubr.bf16.gmra.mxu0 %v987
        %v1597 = vpop.f32.mrf.mxu0
        %v1598 = vadd.f32 0.0, %v1597
        %v1599 = vpop.f32.mrf.mxu0
        %v1600 = vpop.f32.mrf.mxu0
        %v1601 = vadd.f32 0.0, %v1600
        %v1602 = vpop.f32.mrf.mxu0
        %1603 = vdwg.mxu0
        %1604 = vmatprep.subr.bf16.mxu0 0
        %1605 = vmatpush1.bf16.msra.mxu0 0
        %1606 = vmatprep.subr.bf16.mxu0 0
        %1607 = vmatpush1.bf16.msra.mxu0 0
        %1608 = vmatprep.subr.bf16.mxu0 0
        %1609 = vmatpush1.bf16.msra.mxu0 0
        %1610 = vmatprep.subr.bf16.mxu0 0
        %1611 = vmatpush1.bf16.msra.mxu0 0
        %1612 = vmatprep.subr.bf16.mxu0 0
        %1613 = vmatpush1.bf16.msra.mxu0 0
        %1614 = vmatprep.subr.bf16.mxu0 0
        %1615 = vmatpush1.bf16.msra.mxu0 0
        %1616 = vmatprep.subr.bf16.mxu0 0
        %1617 = vmatpush1.bf16.msra.mxu0 0
        %1618 = vmatprep.subr.bf16.mxu0 0
        %1619 = vmatpush1.bf16.msra.mxu0 %v976
        %1620 = vmatprep.subr.bf16.mxu0 0
        %1621 = vmatpush2.bf16.msra.mxu0 0
        %1622 = vmatprep.subr.bf16.mxu0 0
        %1623 = vmatpush2.bf16.msra.mxu0 0
        %1624 = vmatprep.subr.bf16.mxu0 0
        %1625 = vmatpush2.bf16.msra.mxu0 0
        %1626 = vmatprep.subr.bf16.mxu0 0
        %1627 = vmatpush2.bf16.msra.mxu0 0
        %1628 = vmatprep.subr.bf16.mxu0 0
        %1629 = vmatpush2.bf16.msra.mxu0 0
        %1630 = vmatprep.subr.bf16.mxu0 0
        %1631 = vmatpush2.bf16.msra.mxu0 0
        %1632 = vmatprep.subr.bf16.mxu0 0
        %1633 = vmatpush2.bf16.msra.mxu0 0
        %1634 = vmatprep.subr.bf16.mxu0 0
        %1635 = vmatpush2.bf16.msra.mxu0 0
        %1636 = vmatprep.mubr.bf16.mxu0 0
        %1637 = vmatmul.mubr.bf16.gmra.mxu0 %v987
        %v1638 = vpop.f32.mrf.mxu0
        %v1639 = vadd.f32 0.0, %v1638
        %v1640 = vpop.f32.mrf.mxu0
        %v1641 = vpop.f32.mrf.mxu0
        %v1642 = vadd.f32 0.0, %v1641
        %v1643 = vpop.f32.mrf.mxu0
        %1644 = vdwg.mxu0
        %1645 = vmatprep.subr.bf16.mxu0 0
        %1646 = vmatpush1.bf16.msra.mxu0 0
        %1647 = vmatprep.subr.bf16.mxu0 0
        %1648 = vmatpush1.bf16.msra.mxu0 0
        %1649 = vmatprep.subr.bf16.mxu0 0
        %1650 = vmatpush1.bf16.msra.mxu0 0
        %1651 = vmatprep.subr.bf16.mxu0 0
        %1652 = vmatpush1.bf16.msra.mxu0 0
        %1653 = vmatprep.subr.bf16.mxu0 0
        %1654 = vmatpush1.bf16.msra.mxu0 0
        %1655 = vmatprep.subr.bf16.mxu0 0
        %1656 = vmatpush1.bf16.msra.mxu0 0
        %1657 = vmatprep.subr.bf16.mxu0 0
        %1658 = vmatpush1.bf16.msra.mxu0 0
        %1659 = vmatprep.subr.bf16.mxu0 0
        %1660 = vmatpush1.bf16.msra.mxu0 %v977
        %1661 = vmatprep.subr.bf16.mxu0 0
        %1662 = vmatpush2.bf16.msra.mxu0 0
        %1663 = vmatprep.subr.bf16.mxu0 0
        %1664 = vmatpush2.bf16.msra.mxu0 0
        %1665 = vmatprep.subr.bf16.mxu0 0
        %1666 = vmatpush2.bf16.msra.mxu0 0
        %1667 = vmatprep.subr.bf16.mxu0 0
        %1668 = vmatpush2.bf16.msra.mxu0 0
        %1669 = vmatprep.subr.bf16.mxu0 0
        %1670 = vmatpush2.bf16.msra.mxu0 0
        %1671 = vmatprep.subr.bf16.mxu0 0
        %1672 = vmatpush2.bf16.msra.mxu0 0
        %1673 = vmatprep.subr.bf16.mxu0 0
        %1674 = vmatpush2.bf16.msra.mxu0 0
        %1675 = vmatprep.subr.bf16.mxu0 0
        %1676 = vmatpush2.bf16.msra.mxu0 0
        %1677 = vmatprep.mubr.bf16.mxu0 0
        %1678 = vmatmul.mubr.bf16.gmra.mxu0 %v987
        %v1679 = vpop.f32.mrf.mxu0
        %v1680 = vadd.f32 0.0, %v1679
        %v1681 = vpop.f32.mrf.mxu0
        %v1682 = vpop.f32.mrf.mxu0
        %v1683 = vadd.f32 0.0, %v1682
        %v1684 = vpop.f32.mrf.mxu0
        %1685 = vdwg.mxu0
        %1686 = vmatprep.subr.bf16.mxu0 0
        %1687 = vmatpush1.bf16.msra.mxu0 0
        %1688 = vmatprep.subr.bf16.mxu0 0
        %1689 = vmatpush1.bf16.msra.mxu0 0
        %1690 = vmatprep.subr.bf16.mxu0 0
        %1691 = vmatpush1.bf16.msra.mxu0 0
        %1692 = vmatprep.subr.bf16.mxu0 0
        %1693 = vmatpush1.bf16.msra.mxu0 0
        %1694 = vmatprep.subr.bf16.mxu0 0
        %1695 = vmatpush1.bf16.msra.mxu0 0
        %1696 = vmatprep.subr.bf16.mxu0 0
        %1697 = vmatpush1.bf16.msra.mxu0 0
        %1698 = vmatprep.subr.bf16.mxu0 0
        %1699 = vmatpush1.bf16.msra.mxu0 0
        %1700 = vmatprep.subr.bf16.mxu0 0
        %1701 = vmatpush1.bf16.msra.mxu0 %v978
        %1702 = vmatprep.subr.bf16.mxu0 0
        %1703 = vmatpush2.bf16.msra.mxu0 0
        %1704 = vmatprep.subr.bf16.mxu0 0
        %1705 = vmatpush2.bf16.msra.mxu0 0
        %1706 = vmatprep.subr.bf16.mxu0 0
        %1707 = vmatpush2.bf16.msra.mxu0 0
        %1708 = vmatprep.subr.bf16.mxu0 0
        %1709 = vmatpush2.bf16.msra.mxu0 0
        %1710 = vmatprep.subr.bf16.mxu0 0
        %1711 = vmatpush2.bf16.msra.mxu0 0
        %1712 = vmatprep.subr.bf16.mxu0 0
        %1713 = vmatpush2.bf16.msra.mxu0 0
        %1714 = vmatprep.subr.bf16.mxu0 0
        %1715 = vmatpush2.bf16.msra.mxu0 0
        %1716 = vmatprep.subr.bf16.mxu0 0
        %1717 = vmatpush2.bf16.msra.mxu0 0
        %1718 = vmatprep.mubr.bf16.mxu0 0
        %1719 = vmatmul.mubr.bf16.gmra.mxu0 %v987
        %v1720 = vpop.f32.mrf.mxu0
        %v1721 = vadd.f32 0.0, %v1720
        %v1722 = vpop.f32.mrf.mxu0
        %v1723 = vpop.f32.mrf.mxu0
        %v1724 = vadd.f32 0.0, %v1723
        %v1725 = vpop.f32.mrf.mxu0
        %1726 = vdwg.mxu0
        %1727 = vmatprep.subr.bf16.mxu0 0
        %1728 = vmatpush1.bf16.msra.mxu0 0
        %1729 = vmatprep.subr.bf16.mxu0 0
        %1730 = vmatpush1.bf16.msra.mxu0 0
        %1731 = vmatprep.subr.bf16.mxu0 0
        %1732 = vmatpush1.bf16.msra.mxu0 0
        %1733 = vmatprep.subr.bf16.mxu0 0
        %1734 = vmatpush1.bf16.msra.mxu0 0
        %1735 = vmatprep.subr.bf16.mxu0 0
        %1736 = vmatpush1.bf16.msra.mxu0 0
        %1737 = vmatprep.subr.bf16.mxu0 0
        %1738 = vmatpush1.bf16.msra.mxu0 0
        %1739 = vmatprep.subr.bf16.mxu0 0
        %1740 = vmatpush1.bf16.msra.mxu0 0
        %1741 = vmatprep.subr.bf16.mxu0 0
        %1742 = vmatpush1.bf16.msra.mxu0 %v979
        %1743 = vmatprep.subr.bf16.mxu0 0
        %1744 = vmatpush2.bf16.msra.mxu0 0
        %1745 = vmatprep.subr.bf16.mxu0 0
        %1746 = vmatpush2.bf16.msra.mxu0 0
        %1747 = vmatprep.subr.bf16.mxu0 0
        %1748 = vmatpush2.bf16.msra.mxu0 0
        %1749 = vmatprep.subr.bf16.mxu0 0
        %1750 = vmatpush2.bf16.msra.mxu0 0
        %1751 = vmatprep.subr.bf16.mxu0 0
        %1752 = vmatpush2.bf16.msra.mxu0 0
        %1753 = vmatprep.subr.bf16.mxu0 0
        %1754 = vmatpush2.bf16.msra.mxu0 0
        %1755 = vmatprep.subr.bf16.mxu0 0
        %1756 = vmatpush2.bf16.msra.mxu0 0
        %1757 = vmatprep.subr.bf16.mxu0 0
        %1758 = vmatpush2.bf16.msra.mxu0 0
        %1759 = vmatprep.mubr.bf16.mxu0 0
        %1760 = vmatmul.mubr.bf16.gmra.mxu0 %v987
        %v1761 = vpop.f32.mrf.mxu0
        %v1762 = vadd.f32 0.0, %v1761
        %v1763 = vpop.f32.mrf.mxu0
        %v1764 = vpop.f32.mrf.mxu0
        %v1765 = vadd.f32 0.0, %v1764
        %v1766 = vpop.f32.mrf.mxu0
        %1767 = vdwg.mxu0
        %1768 = vmatprep.subr.bf16.mxu0 0
        %1769 = vmatpush1.bf16.msra.mxu0 0
        %1770 = vmatprep.subr.bf16.mxu0 0
        %1771 = vmatpush1.bf16.msra.mxu0 0
        %1772 = vmatprep.subr.bf16.mxu0 0
        %1773 = vmatpush1.bf16.msra.mxu0 0
        %1774 = vmatprep.subr.bf16.mxu0 0
        %1775 = vmatpush1.bf16.msra.mxu0 0
        %1776 = vmatprep.subr.bf16.mxu0 0
        %1777 = vmatpush1.bf16.msra.mxu0 0
        %1778 = vmatprep.subr.bf16.mxu0 0
        %1779 = vmatpush1.bf16.msra.mxu0 0
        %1780 = vmatprep.subr.bf16.mxu0 0
        %1781 = vmatpush1.bf16.msra.mxu0 0
        %1782 = vmatprep.subr.bf16.mxu0 0
        %1783 = vmatpush1.bf16.msra.mxu0 %v980
        %1784 = vmatprep.subr.bf16.mxu0 0
        %1785 = vmatpush2.bf16.msra.mxu0 0
        %1786 = vmatprep.subr.bf16.mxu0 0
        %1787 = vmatpush2.bf16.msra.mxu0 0
        %1788 = vmatprep.subr.bf16.mxu0 0
        %1789 = vmatpush2.bf16.msra.mxu0 0
        %1790 = vmatprep.subr.bf16.mxu0 0
        %1791 = vmatpush2.bf16.msra.mxu0 0
        %1792 = vmatprep.subr.bf16.mxu0 0
        %1793 = vmatpush2.bf16.msra.mxu0 0
        %1794 = vmatprep.subr.bf16.mxu0 0
        %1795 = vmatpush2.bf16.msra.mxu0 0
        %1796 = vmatprep.subr.bf16.mxu0 0
        %1797 = vmatpush2.bf16.msra.mxu0 0
        %1798 = vmatprep.subr.bf16.mxu0 0
        %1799 = vmatpush2.bf16.msra.mxu0 0
        %1800 = vmatprep.mubr.bf16.mxu0 0
        %1801 = vmatmul.mubr.bf16.gmra.mxu0 %v987
        %v1802 = vpop.f32.mrf.mxu0
        %v1803 = vadd.f32 0.0, %v1802
        %v1804 = vpop.f32.mrf.mxu0
        %v1805 = vpop.f32.mrf.mxu0
        %v1806 = vadd.f32 0.0, %v1805
        %v1807 = vpop.f32.mrf.mxu0
        %1808 = vdwg.mxu0
        %v1809 = vmul.f32 %v1024, %v1024
        %v1810 = vmul.f32 %v1027, %v1027
        %v1811 = vmul.f32 %v1065, %v1065
        %v1812 = vmul.f32 %v1068, %v1068
        %v1813 = vmul.f32 %v1106, %v1106
        %v1814 = vmul.f32 %v1109, %v1109
        %v1815 = vmul.f32 %v1147, %v1147
        %v1816 = vmul.f32 %v1150, %v1150
        %v1817 = vmul.f32 %v1188, %v1188
        %v1818 = vmul.f32 %v1191, %v1191
        %v1819 = vmul.f32 %v1229, %v1229
        %v1820 = vmul.f32 %v1232, %v1232
        %v1821 = vmul.f32 %v1270, %v1270
        %v1822 = vmul.f32 %v1273, %v1273
        %v1823 = vmul.f32 %v1311, %v1311
        %v1824 = vmul.f32 %v1314, %v1314
        %v1825 = vmul.f32 %v1024, %v1188
        %v1826 = vmul.f32 %v1027, %v1191
        %v1827 = vmul.f32 %v1065, %v1229
        %v1828 = vmul.f32 %v1068, %v1232
        %v1829 = vmul.f32 %v1106, %v1270
        %v1830 = vmul.f32 %v1109, %v1273
        %v1831 = vmul.f32 %v1147, %v1311
        %v1832 = vmul.f32 %v1150, %v1314
        %v1833 = vsub.f32 %v1352, %v1809
        %v1834 = vsub.f32 %v1355, %v1810
        %v1835 = vsub.f32 %v1393, %v1811
        %v1836 = vsub.f32 %v1396, %v1812
        %v1837 = vsub.f32 %v1434, %v1813
        %v1838 = vsub.f32 %v1437, %v1814
        %v1839 = vsub.f32 %v1475, %v1815
        %v1840 = vsub.f32 %v1478, %v1816
        %v1841 = vsub.f32 %v1516, %v1817
        %v1842 = vsub.f32 %v1519, %v1818
        %v1843 = vsub.f32 %v1557, %v1819
        %v1844 = vsub.f32 %v1560, %v1820
        %v1845 = vsub.f32 %v1598, %v1821
        %v1846 = vsub.f32 %v1601, %v1822
        %v1847 = vsub.f32 %v1639, %v1823
        %v1848 = vsub.f32 %v1642, %v1824
        %v1849 = vsub.f32 %v1680, %v1825
        %v1850 = vsub.f32 %v1683, %v1826
        %v1851 = vsub.f32 %v1721, %v1827
        %v1852 = vsub.f32 %v1724, %v1828
        %v1853 = vsub.f32 %v1762, %v1829
        %v1854 = vsub.f32 %v1765, %v1830
        %v1855 = vsub.f32 %v1803, %v1831
        %v1856 = vsub.f32 %v1806, %v1832
        %v1857 = vmul.f32 %v1825, 2.0
        %v1858 = vmul.f32 %v1826, 2.0
        %v1859 = vmul.f32 %v1827, 2.0
        %v1860 = vmul.f32 %v1828, 2.0
        %v1861 = vmul.f32 %v1829, 2.0
        %v1862 = vmul.f32 %v1830, 2.0
        %v1863 = vmul.f32 %v1831, 2.0
        %v1864 = vmul.f32 %v1832, 2.0
        %v1865 = vadd.f32 %v1857, 0.0001
        %v1866 = vadd.f32 %v1858, 0.0001
        %v1867 = vadd.f32 %v1859, 0.0001
        %v1868 = vadd.f32 %v1860, 0.0001
        %v1869 = vadd.f32 %v1861, 0.0001
        %v1870 = vadd.f32 %v1862, 0.0001
        %v1871 = vadd.f32 %v1863, 0.0001
        %v1872 = vadd.f32 %v1864, 0.0001
        %v1873 = vmul.f32 %v1849, 2.0
        %v1874 = vmul.f32 %v1850, 2.0
        %v1875 = vmul.f32 %v1851, 2.0
        %v1876 = vmul.f32 %v1852, 2.0
        %v1877 = vmul.f32 %v1853, 2.0
        %v1878 = vmul.f32 %v1854, 2.0
        %v1879 = vmul.f32 %v1855, 2.0
        %v1880 = vmul.f32 %v1856, 2.0
        %v1881 = vadd.f32 %v1873, 0.0009
        %v1882 = vadd.f32 %v1874, 0.0009
        %v1883 = vadd.f32 %v1875, 0.0009
        %v1884 = vadd.f32 %v1876, 0.0009
        %v1885 = vadd.f32 %v1877, 0.0009
        %v1886 = vadd.f32 %v1878, 0.0009
        %v1887 = vadd.f32 %v1879, 0.0009
        %v1888 = vadd.f32 %v1880, 0.0009
        %v1889 = vmul.f32 %v1865, %v1881
        %v1890 = vmul.f32 %v1866, %v1882
        %v1891 = vmul.f32 %v1867, %v1883
        %v1892 = vmul.f32 %v1868, %v1884
        %v1893 = vmul.f32 %v1869, %v1885
        %v1894 = vmul.f32 %v1870, %v1886
        %v1895 = vmul.f32 %v1871, %v1887
        %v1896 = vmul.f32 %v1872, %v1888
        %v1897 = vadd.f32 %v1809, %v1817
        %v1898 = vadd.f32 %v1810, %v1818
        %v1899 = vadd.f32 %v1811, %v1819
        %v1900 = vadd.f32 %v1812, %v1820
        %v1901 = vadd.f32 %v1813, %v1821
        %v1902 = vadd.f32 %v1814, %v1822
        %v1903 = vadd.f32 %v1815, %v1823
        %v1904 = vadd.f32 %v1816, %v1824
        %v1905 = vadd.f32 %v1897, 0.0001
        %v1906 = vadd.f32 %v1898, 0.0001
        %v1907 = vadd.f32 %v1899, 0.0001
        %v1908 = vadd.f32 %v1900, 0.0001
        %v1909 = vadd.f32 %v1901, 0.0001
        %v1910 = vadd.f32 %v1902, 0.0001
        %v1911 = vadd.f32 %v1903, 0.0001
        %v1912 = vadd.f32 %v1904, 0.0001
        %v1913 = vadd.f32 %v1833, %v1841
        %v1914 = vadd.f32 %v1834, %v1842
        %v1915 = vadd.f32 %v1835, %v1843
        %v1916 = vadd.f32 %v1836, %v1844
        %v1917 = vadd.f32 %v1837, %v1845
        %v1918 = vadd.f32 %v1838, %v1846
        %v1919 = vadd.f32 %v1839, %v1847
        %v1920 = vadd.f32 %v1840, %v1848
        %v1921 = vadd.f32 %v1913, 0.0009
        %v1922 = vadd.f32 %v1914, 0.0009
        %v1923 = vadd.f32 %v1915, 0.0009
        %v1924 = vadd.f32 %v1916, 0.0009
        %v1925 = vadd.f32 %v1917, 0.0009
        %v1926 = vadd.f32 %v1918, 0.0009
        %v1927 = vadd.f32 %v1919, 0.0009
        %v1928 = vadd.f32 %v1920, 0.0009
        %v1929 = vmul.f32 %v1905, %v1921
        %v1930 = vmul.f32 %v1906, %v1922
        %v1931 = vmul.f32 %v1907, %v1923
        %v1932 = vmul.f32 %v1908, %v1924
        %v1933 = vmul.f32 %v1909, %v1925
        %v1934 = vmul.f32 %v1910, %v1926
        %v1935 = vmul.f32 %v1911, %v1927
        %v1936 = vmul.f32 %v1912, %v1928
        %v1937 = vrcp.pop %v1929
        %v1938 = vrcp.pop %v1930
        %v1939 = vrcp.pop %v1931
        %v1940 = vrcp.pop %v1932
        %v1941 = vrcp.pop %v1933
        %v1942 = vrcp.pop %v1934
        %v1943 = vrcp.pop %v1935
        %v1944 = vrcp.pop %v1936
        %v1945 = vmul.f32 %v1889, %v1937
        %v1946 = vmul.f32 %v1890, %v1938
        %v1947 = vmul.f32 %v1891, %v1939
        %v1948 = vmul.f32 %v1892, %v1940
        %v1949 = vmul.f32 %v1893, %v1941
        %v1950 = vmul.f32 %v1894, %v1942
        %v1951 = vmul.f32 %v1895, %v1943
        %v1952 = vmul.f32 %v1896, %v1944
        %v1953 = vsel %vm707, %v1945, 0.0
        %v1954 = vsel %vm707, %v1946, 0.0
        %v1955 = vadd.f32 %v1953, %v1954
        %v1956 = vsel %vm707, %v1947, 0.0
        %v1957 = vadd.f32 %v1955, %v1956
        %v1958 = vsel %vm707, %v1948, 0.0
        %v1959 = vadd.f32 %v1957, %v1958
        %v1960 = vsel %vm707, %v1949, 0.0
        %v1961 = vadd.f32 %v1959, %v1960
        %v1962 = vsel %vm707, %v1950, 0.0
        %v1963 = vadd.f32 %v1961, %v1962
        %v1964 = vsel %vm707, %v1951, 0.0
        %v1965 = vadd.f32 %v1963, %v1964
        %v1966 = vsel %vm707, %v1952, 0.0
        %v1967 = vadd.f32 %v1965, %v1966
        %1968 = vadd.xlane.f32.xlu0 %v1967
        %v1969 = vpop.xlane.xlu0 %1968
        %v1970 = vrot.slane %v1969, 4
        %v1971 = vadd.f32 %v1969, %v1970
        %v1972 = vrot.slane %v1971, 2
        %v1973 = vadd.f32 %v1971, %v1972
        %v1974 = vrot.slane %v1973, 1
        %v1975 = vadd.f32 %v1973, %v1974
        %s1976 = vtos %v1975
        %v1977 = vstv %s1976
        %vm1978 = vcmask 0
        %1979 = vst.msk [vmem:[%s314] sm:$0x1] %vm1978, %v1977
        %p1980 = scmp.lt.s32.totalorder %s26, 1
        %s1981 = scalar_select %p1980, %s26, 1
        %p1982 = scmp.lt.s32.totalorder %s27, 0
        %s1983 = scalar_select %p1982, %s27, 0
        %s1984 = sadd.s32 %s1983, %s1981
        %s1985 = scalar_lea.vmem %s4, %s1984
        // Predicated region
        $region53: #{tpu_custom_call.1} parent=35 // pred_check
          %p1986 = pneg %p152
        $region54: #{tpu_custom_call.1} parent=35 // pred_check_branch
          %1988 = sbr.rel (%p1986) target = $region56
        $region55: #{tpu_custom_call.1} parent=35 // pred_region
          _
        $region56: #{tpu_custom_call.1} parent=35 // pred_fallthru
          _
      $region36: #{tpu_custom_call.1} parent=5 // pred_fallthru
        _
      %p1989 = scmp.le.s32.totalorder 2, %s17
      // Predicated region
      $region57: #{tpu_custom_call.1} parent=5 // pred_check
        %p1990 = pneg %p1989
      $region58: #{tpu_custom_call.1} parent=5 // pred_check_branch
        %1992 = sbr.rel (%p1990) target = $region60
      $region59: #{tpu_custom_call.1} parent=5 // pred_region
        %s1993 = ssub.s32 %s17, 2
        // Predicated region
        $region61: #{tpu_custom_call.1} parent=59 // pred_check
          %p1994 = pneg %p158
        $region62: #{tpu_custom_call.1} parent=59 // pred_check_branch
          %1996 = sbr.rel (%p1994) target = $region64
        $region63: #{tpu_custom_call.1} parent=59 // pred_region
          %p1997 = scmp.lt.s32.totalorder %s28, 1
          %s1998 = scalar_select %p1997, %s28, 1
          %p1999 = scmp.lt.s32.totalorder %s29, 0
          %s2000 = scalar_select %p1999, %s29, 0
          %s2001 = sadd.s32 %s2000, %s1998
          %s2002 = scalar_lea.vmem %s4, %s2001
        $region64: #{tpu_custom_call.1} parent=59 // pred_fallthru
          _
      $region60: #{tpu_custom_call.1} parent=5 // pred_fallthru
        _
    $region6: #{tpu_custom_call.1} parent=1 // loop_footer
      %s21 = sadd.s32 1, %s17
    $region7: #{tpu_custom_call.1} parent=1 // loop_footer_branch
      %16 = sbr.rel target = $region3
    $region8: #{tpu_custom_call.1} parent=1 // loop_exit
      _
    %2003 = vsyncpa [#allocation4], 1
    %s2004 = scalar_lea.sflag [#allocation4], 1
    %2005 = vsyncpa %s2004, 1
    %2006 = vsyncpa [#allocation6], 1
    %s2007 = scalar_lea.sflag [#allocation6], 1
    %2008 = vsyncpa %s2007, 1
    %2009 = vsyncpa [#allocation9], 1

</llo_original>
